<compile_context>
chip_gen: v7x
topology: tpu7x:2x2x1
jax: 0.10.0
libtpu: 0.0.40
codegen_flags: <defaults>
</compile_context>

<pallas_src>
import math

import jax
import jax.numpy as jnp
from jax import lax
from jax.experimental import pallas as pl
from jax.experimental.pallas import tpu as pltpu

LANE = 128                     # pad Cout up to a multiple of this (lane-dense stores)
COMPUTE_DTYPE = jnp.bfloat16   # MXU operand dtype; accumulation stays float32


def _round_up(v, m):
    return ((v + m - 1) // m) * m


def _make_kernel(k, W, P):
    """Build the per-image conv kernel.

    x_ref : (1, Sp, Cin)        flattened NHWC image rows (bf16), zero padded
    w_ref : (k*k, Cin, Coutp)   fused (W + dW) weight, tap-major (bf16)
    b_ref : (1, Coutp)          2 * conv bias (f32)
    o_ref : (1, P, Coutp)       flat output rows, P = OH * W (only columns
                                0..OW-1 of each output row are valid; the rest
                                is sliced off in the wrapper)
    """
    def kernel(x_ref, w_ref, b_ref, o_ref):
        x_img = x_ref[0]        # (Sp, Cin) bf16, loaded once; sliced k*k times below
        w_all = w_ref[...]      # (k*k, Cin, Coutp) bf16, VMEM-resident across grid
        coutp = w_all.shape[-1]
        acc = jnp.zeros((P, coutp), jnp.float32)
        # Convolution as k*k row-shifted matmuls over the flattened spatial axis:
        #   out[p, :] += x[p + kh*W + kw, :] @ Wsum[kh, kw, :, :]
        # All slice starts are static, so this unrolls into k*k MXU ops.
        for kh in range(k):
            for kw in range(k):
                s = kh * W + kw
                slab = x_img[s:s + P, :]                         # (P, Cin)
                acc = acc + jnp.dot(slab, w_all[kh * k + kw],
                                    preferred_element_type=jnp.float32)
        o_ref[0] = (acc + b_ref[...]).astype(o_ref.dtype)

    return kernel


def lora_conv_forward(x, conv_w, conv_b, lora_A, lora_B, scaling):
    """x: (N, Cin, H, W) NCHW.  conv_w: (Cout, Cin, k, k).  Returns NCHW."""
    N, Cin, H, W = x.shape
    Cout, _, k, _ = conv_w.shape
    OH, OW = H - k + 1, W - k + 1            # stride=1, padding=0 (Conv2d defaults)
    P = OH * W                               # flat output rows per image (full width)
    Coutp = _round_up(Cout, LANE)
    Sp = _round_up(H * W + k - 1, 8)         # rows needed for the largest shift

    # ---- tiny rank-r glue + weight fusion (plain JAX, negligible cost) ----
    delta_w = (lora_B @ lora_A).reshape(Cout, Cin, k, k) * scaling
    w_sum = conv_w + delta_w                                         # (Cout, Cin, k, k)
    w_taps = w_sum.transpose(2, 3, 1, 0).reshape(k * k, Cin, Cout)   # (kh*k+kw, ci, co)
    w_taps = jnp.pad(w_taps, ((0, 0), (0, 0), (0, Coutp - Cout))).astype(COMPUTE_DTYPE)
    b2 = jnp.pad((2.0 * conv_b).reshape(1, Cout).astype(jnp.float32),
                 ((0, 0), (0, Coutp - Cout)))                        # bias appears twice

    # ---- input: single NCHW->NHWC transpose, flatten spatial, zero-pad rows ----
    x2 = jnp.transpose(x, (0, 2, 3, 1)).reshape(N, H * W, Cin)
    x2 = jnp.pad(x2, ((0, 0), (0, Sp - H * W), (0, 0))).astype(COMPUTE_DTYPE)

    out2 = pl.pallas_call(
        _make_kernel(k, W, P),
        out_shape=jax.ShapeDtypeStruct((N, P, Coutp), x.dtype),
        grid_spec=pltpu.PrefetchScalarGridSpec(
            num_scalar_prefetch=0,
            grid=(N,),
            in_specs=[
                pl.BlockSpec((1, Sp, Cin), lambda n: (n, 0, 0)),
                pl.BlockSpec((k * k, Cin, Coutp), lambda n: (0, 0, 0)),
                pl.BlockSpec((1, Coutp), lambda n: (0, 0)),
            ],
            out_specs=pl.BlockSpec((1, P, Coutp), lambda n: (n, 0, 0)),
        ),
        compiler_params=pltpu.CompilerParams(
            dimension_semantics=("parallel",),
            vmem_limit_bytes=32 * 1024 * 1024,
        ),
    )(x2, w_taps, b2)

    # Drop invalid right-edge columns and channel padding, return NCHW.
    out = out2.reshape(N, OH, W, Coutp)[:, :, :OW, :Cout]
    return jnp.transpose(out, (0, 3, 1, 2))


if __name__ == "__main__":
    key = jax.random.PRNGKey(0)
    N, Cin, H, Wd = 2, 4, 16, 16
    Cout, k = 8, 3
    r, lora_alpha = 2, 4
    scaling = lora_alpha / r

    kw_, kb_, kA_, kB_, kx_ = jax.random.split(key, 5)

    # Conv2d default init: kaiming_uniform(a=sqrt(5)) -> U(-1/sqrt(fan_in), +)
    fan_in = Cin * k * k
    bound = 1.0 / math.sqrt(fan_in)
    conv_w = jax.random.uniform(kw_, (Cout, Cin, k, k), jnp.float32, -bound, bound)
    conv_b = jax.random.uniform(kb_, (Cout,), jnp.float32, -bound, bound)

    # lora_A: (r*k, Cin*k) kaiming_uniform; lora_B is zero-init in PyTorch — use
    # small random values here so the LoRA branch is numerically exercised.
    a_bound = 1.0 / math.sqrt(Cin * k)
    lora_A = jax.random.uniform(kA_, (r * k, Cin * k), jnp.float32, -a_bound, a_bound)
    lora_B = jax.random.uniform(kB_, (Cout * k, r * k), jnp.float32, -0.1, 0.1)

    x = jax.random.normal(kx_, (N, Cin, H, Wd), jnp.float32)

    fwd = jax.jit(lora_conv_forward)
    out = jax.block_until_ready(fwd(x, conv_w, conv_b, lora_A, lora_B, scaling))

    # Pure-JAX reference of the exact PyTorch forward semantics, with operands
    # rounded to bf16 exactly as the kernel sees them (accumulation stays f32).
    def conv2d_f32(x_, w_):
        return lax.conv_general_dilated(
            x_, w_, window_strides=(1, 1), padding="VALID",
            dimension_numbers=("NCHW", "OIHW", "NCHW"),
            precision=lax.Precision.HIGHEST)

    delta_w = (lora_B @ lora_A).reshape(Cout, Cin, k, k) * scaling
    w_sum = conv_w + delta_w
    x_bf = x.astype(jnp.bfloat16).astype(jnp.float32)
    w_bf = w_sum.astype(jnp.bfloat16).astype(jnp.float32)
    ref = conv2d_f32(x_bf, w_bf) + 2.0 * conv_b.reshape(1, -1, 1, 1)

    assert out.shape == ref.shape == (N, Cout, H - k + 1, Wd - k + 1)
    max_err = float(jnp.max(jnp.abs(out - ref)))
    assert jnp.allclose(out, ref, atol=2e-3, rtol=2e-3), max_err
    print("KERNEL_OK")
</pallas_src>

<mosaic_0001>
module attributes {stable_mosaic.version = 11 : i64} {
  func.func @kernel(%arg0: i32, %arg1: memref<1x264x4xbf16, #tpu.memory_space<vmem>>, %arg2: memref<9x4x128xbf16, #tpu.memory_space<vmem>>, %arg3: memref<1x128xf32, #tpu.memory_space<vmem>>, %arg4: memref<1x224x128xf32, #tpu.memory_space<vmem>>) attributes {dimension_semantics = [#tpu.dimension_semantics<parallel>], iteration_bounds = array<i64: 2>, scalar_prefetch = 0 : i64, scratch_operands = 0 : i64, tpu.core_type = #tpu.core_type<tc>, window_params = [{transform_indices = @transform_0, window_bounds = array<i64: 1, 264, 4>}, {pipeline_mode = #tpu.pipeline_mode<synchronous>, transform_indices = @transform_1, window_bounds = array<i64: 9, 4, 128>}, {pipeline_mode = #tpu.pipeline_mode<synchronous>, transform_indices = @transform_2, window_bounds = array<i64: 1, 128>}, {transform_indices = @transform_3, window_bounds = array<i64: 1, 224, 128>}]} {
    %c0 = arith.constant 0 : index
    %c0_0 = arith.constant 0 : index
    %c0_1 = arith.constant 0 : index
    %0 = vector.load %arg1[%c0, %c0_0, %c0_1] : memref<1x264x4xbf16, #tpu.memory_space<vmem>>, vector<1x264x4xbf16>
    %1 = vector.shape_cast %0 : vector<1x264x4xbf16> to vector<264x4xbf16>
    %c0_2 = arith.constant 0 : index
    %c0_3 = arith.constant 0 : index
    %c0_4 = arith.constant 0 : index
    %2 = vector.load %arg2[%c0_2, %c0_3, %c0_4] : memref<9x4x128xbf16, #tpu.memory_space<vmem>>, vector<9x4x128xbf16>
    %cst = arith.constant 0.000000e+00 : f32
    %3 = vector.broadcast %cst : f32 to vector<224x128xf32>
    %4 = vector.extract_strided_slice %1 {offsets = [0, 0], sizes = [224, 4], strides = [1, 1]} : vector<264x4xbf16> to vector<224x4xbf16>
    %5 = vector.extract_strided_slice %2 {offsets = [0, 0, 0], sizes = [1, 4, 128], strides = [1, 1, 1]} : vector<9x4x128xbf16> to vector<1x4x128xbf16>
    %6 = vector.shape_cast %5 : vector<1x4x128xbf16> to vector<4x128xbf16>
    %cst_5 = arith.constant dense<0.000000e+00> : vector<224x128xf32>
    %7 = tpu.matmul %4, %6, %cst_5 {dimension_numbers = #tpu.dot_dimension_numbers<[1], [0], [0], [1], [0, 0, 1, 1], [], []>} : vector<224x4xbf16>, vector<4x128xbf16>, vector<224x128xf32> -> vector<224x128xf32>
    %8 = arith.addf %3, %7 : vector<224x128xf32>
    %9 = vector.extract_strided_slice %1 {offsets = [1, 0], sizes = [224, 4], strides = [1, 1]} : vector<264x4xbf16> to vector<224x4xbf16>
    %10 = vector.extract_strided_slice %2 {offsets = [1, 0, 0], sizes = [1, 4, 128], strides = [1, 1, 1]} : vector<9x4x128xbf16> to vector<1x4x128xbf16>
    %11 = vector.shape_cast %10 : vector<1x4x128xbf16> to vector<4x128xbf16>
    %cst_6 = arith.constant dense<0.000000e+00> : vector<224x128xf32>
    %12 = tpu.matmul %9, %11, %cst_6 {dimension_numbers = #tpu.dot_dimension_numbers<[1], [0], [0], [1], [0, 0, 1, 1], [], []>} : vector<224x4xbf16>, vector<4x128xbf16>, vector<224x128xf32> -> vector<224x128xf32>
    %13 = arith.addf %8, %12 : vector<224x128xf32>
    %14 = vector.extract_strided_slice %1 {offsets = [2, 0], sizes = [224, 4], strides = [1, 1]} : vector<264x4xbf16> to vector<224x4xbf16>
    %15 = vector.extract_strided_slice %2 {offsets = [2, 0, 0], sizes = [1, 4, 128], strides = [1, 1, 1]} : vector<9x4x128xbf16> to vector<1x4x128xbf16>
    %16 = vector.shape_cast %15 : vector<1x4x128xbf16> to vector<4x128xbf16>
    %cst_7 = arith.constant dense<0.000000e+00> : vector<224x128xf32>
    %17 = tpu.matmul %14, %16, %cst_7 {dimension_numbers = #tpu.dot_dimension_numbers<[1], [0], [0], [1], [0, 0, 1, 1], [], []>} : vector<224x4xbf16>, vector<4x128xbf16>, vector<224x128xf32> -> vector<224x128xf32>
    %18 = arith.addf %13, %17 : vector<224x128xf32>
    %19 = vector.extract_strided_slice %1 {offsets = [16, 0], sizes = [224, 4], strides = [1, 1]} : vector<264x4xbf16> to vector<224x4xbf16>
    %20 = vector.extract_strided_slice %2 {offsets = [3, 0, 0], sizes = [1, 4, 128], strides = [1, 1, 1]} : vector<9x4x128xbf16> to vector<1x4x128xbf16>
    %21 = vector.shape_cast %20 : vector<1x4x128xbf16> to vector<4x128xbf16>
    %cst_8 = arith.constant dense<0.000000e+00> : vector<224x128xf32>
    %22 = tpu.matmul %19, %21, %cst_8 {dimension_numbers = #tpu.dot_dimension_numbers<[1], [0], [0], [1], [0, 0, 1, 1], [], []>} : vector<224x4xbf16>, vector<4x128xbf16>, vector<224x128xf32> -> vector<224x128xf32>
    %23 = arith.addf %18, %22 : vector<224x128xf32>
    %24 = vector.extract_strided_slice %1 {offsets = [17, 0], sizes = [224, 4], strides = [1, 1]} : vector<264x4xbf16> to vector<224x4xbf16>
    %25 = vector.extract_strided_slice %2 {offsets = [4, 0, 0], sizes = [1, 4, 128], strides = [1, 1, 1]} : vector<9x4x128xbf16> to vector<1x4x128xbf16>
    %26 = vector.shape_cast %25 : vector<1x4x128xbf16> to vector<4x128xbf16>
    %cst_9 = arith.constant dense<0.000000e+00> : vector<224x128xf32>
    %27 = tpu.matmul %24, %26, %cst_9 {dimension_numbers = #tpu.dot_dimension_numbers<[1], [0], [0], [1], [0, 0, 1, 1], [], []>} : vector<224x4xbf16>, vector<4x128xbf16>, vector<224x128xf32> -> vector<224x128xf32>
    %28 = arith.addf %23, %27 : vector<224x128xf32>
    %29 = vector.extract_strided_slice %1 {offsets = [18, 0], sizes = [224, 4], strides = [1, 1]} : vector<264x4xbf16> to vector<224x4xbf16>
    %30 = vector.extract_strided_slice %2 {offsets = [5, 0, 0], sizes = [1, 4, 128], strides = [1, 1, 1]} : vector<9x4x128xbf16> to vector<1x4x128xbf16>
    %31 = vector.shape_cast %30 : vector<1x4x128xbf16> to vector<4x128xbf16>
    %cst_10 = arith.constant dense<0.000000e+00> : vector<224x128xf32>
    %32 = tpu.matmul %29, %31, %cst_10 {dimension_numbers = #tpu.dot_dimension_numbers<[1], [0], [0], [1], [0, 0, 1, 1], [], []>} : vector<224x4xbf16>, vector<4x128xbf16>, vector<224x128xf32> -> vector<224x128xf32>
    %33 = arith.addf %28, %32 : vector<224x128xf32>
    %34 = vector.extract_strided_slice %1 {offsets = [32, 0], sizes = [224, 4], strides = [1, 1]} : vector<264x4xbf16> to vector<224x4xbf16>
    %35 = vector.extract_strided_slice %2 {offsets = [6, 0, 0], sizes = [1, 4, 128], strides = [1, 1, 1]} : vector<9x4x128xbf16> to vector<1x4x128xbf16>
    %36 = vector.shape_cast %35 : vector<1x4x128xbf16> to vector<4x128xbf16>
    %cst_11 = arith.constant dense<0.000000e+00> : vector<224x128xf32>
    %37 = tpu.matmul %34, %36, %cst_11 {dimension_numbers = #tpu.dot_dimension_numbers<[1], [0], [0], [1], [0, 0, 1, 1], [], []>} : vector<224x4xbf16>, vector<4x128xbf16>, vector<224x128xf32> -> vector<224x128xf32>
    %38 = arith.addf %33, %37 : vector<224x128xf32>
    %39 = vector.extract_strided_slice %1 {offsets = [33, 0], sizes = [224, 4], strides = [1, 1]} : vector<264x4xbf16> to vector<224x4xbf16>
    %40 = vector.extract_strided_slice %2 {offsets = [7, 0, 0], sizes = [1, 4, 128], strides = [1, 1, 1]} : vector<9x4x128xbf16> to vector<1x4x128xbf16>
    %41 = vector.shape_cast %40 : vector<1x4x128xbf16> to vector<4x128xbf16>
    %cst_12 = arith.constant dense<0.000000e+00> : vector<224x128xf32>
    %42 = tpu.matmul %39, %41, %cst_12 {dimension_numbers = #tpu.dot_dimension_numbers<[1], [0], [0], [1], [0, 0, 1, 1], [], []>} : vector<224x4xbf16>, vector<4x128xbf16>, vector<224x128xf32> -> vector<224x128xf32>
    %43 = arith.addf %38, %42 : vector<224x128xf32>
    %44 = vector.extract_strided_slice %1 {offsets = [34, 0], sizes = [224, 4], strides = [1, 1]} : vector<264x4xbf16> to vector<224x4xbf16>
    %45 = vector.extract_strided_slice %2 {offsets = [8, 0, 0], sizes = [1, 4, 128], strides = [1, 1, 1]} : vector<9x4x128xbf16> to vector<1x4x128xbf16>
    %46 = vector.shape_cast %45 : vector<1x4x128xbf16> to vector<4x128xbf16>
    %cst_13 = arith.constant dense<0.000000e+00> : vector<224x128xf32>
    %47 = tpu.matmul %44, %46, %cst_13 {dimension_numbers = #tpu.dot_dimension_numbers<[1], [0], [0], [1], [0, 0, 1, 1], [], []>} : vector<224x4xbf16>, vector<4x128xbf16>, vector<224x128xf32> -> vector<224x128xf32>
    %48 = arith.addf %43, %47 : vector<224x128xf32>
    %c0_14 = arith.constant 0 : index
    %c0_15 = arith.constant 0 : index
    %49 = vector.load %arg3[%c0_14, %c0_15] : memref<1x128xf32, #tpu.memory_space<vmem>>, vector<1x128xf32>
    %50 = vector.broadcast %49 : vector<1x128xf32> to vector<224x128xf32>
    %51 = arith.addf %48, %50 : vector<224x128xf32>
    %c0_16 = arith.constant 0 : index
    %c0_17 = arith.constant 0 : index
    %c0_18 = arith.constant 0 : index
    %52 = vector.load %arg4[%c0_16, %c0_17, %c0_18] : memref<1x224x128xf32, #tpu.memory_space<vmem>>, vector<1x224x128xf32>
    %53 = vector.shape_cast %52 : vector<1x224x128xf32> to vector<224x128xf32>
    %54 = vector.shape_cast %51 : vector<224x128xf32> to vector<1x224x128xf32>
    tpu.vector_store %arg4[%c0_16, %c0_17, %c0_18], %54 {strides = array<i32>} : memref<1x224x128xf32, #tpu.memory_space<vmem>>, vector<1x224x128xf32>,
    return
  }
  func.func @transform_0(%arg0: i32) -> (i32, i32, i32) {
    %c0_i32 = arith.constant 0 : i32
    %c0_i32_0 = arith.constant 0 : i32
    %c0_i32_1 = arith.constant 0 : i32
    return %arg0, %c0_i32, %c0_i32_0 : i32, i32, i32
  }
  func.func @transform_1(%arg0: i32) -> (i32, i32, i32) {
    %c0_i32 = arith.constant 0 : i32
    %c0_i32_0 = arith.constant 0 : i32
    %c0_i32_1 = arith.constant 0 : i32
    %c0_i32_2 = arith.constant 0 : i32
    return %c0_i32, %c0_i32_0, %c0_i32_1 : i32, i32, i32
  }
  func.func @transform_2(%arg0: i32) -> (i32, i32) {
    %c0_i32 = arith.constant 0 : i32
    %c0_i32_0 = arith.constant 0 : i32
    %c0_i32_1 = arith.constant 0 : i32
    return %c0_i32, %c0_i32_0 : i32, i32
  }
  func.func @transform_3(%arg0: i32) -> (i32, i32, i32) {
    %c0_i32 = arith.constant 0 : i32
    %c0_i32_0 = arith.constant 0 : i32
    %c0_i32_1 = arith.constant 0 : i32
    return %arg0, %c0_i32, %c0_i32_0 : i32, i32, i32
  }
}

</mosaic_0001>

<llo_original>
// kernel: lora_conv_forward.1
$region0: #{lora_conv_forward.1}
  #allocation0 [shape = 'u32[]', space=smem, size = 0x4, offset = 0x4, fixed_abs, tag = 'smem constant byte address 0x4 - core index']
  #allocation1 [shape = 'u32[144,128]{1,0:T(1,128)}', space=vmem, size = 0x12000, scoped, tag = 'internal scratch']
  %s0 = inlined_call_operand.vmem [shape: bf16[2,264,4], index: 0, kind: input, shape index: {}]
  %s1 = inlined_call_operand.vmem [shape: bf16[9,4,128], index: 1, kind: input, shape index: {}]
  %s2 = inlined_call_operand.vmem [shape: f32[1,128], index: 2, kind: input, shape index: {}]
  %s3 = inlined_call_operand.vmem [shape: f32[2,224,128], index: 3, kind: output, shape index: {}]
  %s4 = sld [smem:[#allocation0]]
  $region45: #{lora_conv_forward.1} parent=0
    _
  %s6 = ssub.s32 1, %s4
  %s7 = scalar_select 0, %s6, %s4
  loop: start=0, step=1, limit=4
  $region2: #{lora_conv_forward.1} parent=0 // loop_pre_header
    _
  $region3: #{lora_conv_forward.1} parent=0 // loop_header
    %s9 = sphi 0, %s13
    %p10 = scmp.ge.s32.totalorder %s9, 4
    %s19 = sphi 0, %s21
    %s22 = sphi 0, %s19
    %s23 = sphi 0, %s22
    %s39 = sphi 0, %s23
    %s43 = sphi 0, %s43
    %s45 = sphi 0, %s43
    %s46 = sphi 0, %s45
    %s60 = sphi 0, %s46
    %s64 = sphi 0, %s64
    %s66 = sphi 0, %s64
    %s67 = sphi 0, %s66
    %s81 = sphi 0, %s67
    %s87 = sphi 0, %s89
    %s90 = sphi 0, %s87
    %s91 = sphi 0, %s90
    %s107 = sphi 0, %s91
  $region4: #{lora_conv_forward.1} parent=0 // loop_header_branch
    %12 = sbr.rel (%p10) target = $region8
  $region5: #{lora_conv_forward.1} parent=0 // loop_body
    %s14 = ssub.s32 %s9, 1
    %s15 = ssub.s32 %s9, 2
    %s16 = sadd.s32 %s9, 1
    %s17 = ssub.s32 %s9, %s16
    %p18 = scmp.eq.s32.totalorder %s17, 0
    %s20 = sadd.s32 %s19, 1
    %s21 = scalar_select %p18, %s19, %s20
    %p24 = pneg %p18
    %p25 = scmp.eq.s32.totalorder %s9, 1
    %p26 = por %p24, %p25
    %p27 = scmp.ne.s32.totalorder %s19, %s22
    %p28 = scmp.eq.s32.totalorder %s9, 0
    %p29 = por %p27, %p28
    %p30 = scmp.ne.s32.totalorder %s19, %s22
    %p31 = scmp.eq.s32.totalorder %s14, 1
    %p32 = por %p30, %p31
    %p33 = scmp.ne.s32.totalorder %s22, %s23
    %p34 = scmp.eq.s32.totalorder %s14, 0
    %p35 = por %p33, %p34
    %p36 = scmp.ne.s32.totalorder %s22, %s23
    %p37 = scmp.eq.s32.totalorder %s15, 1
    %p38 = por %p36, %p37
    %p40 = scmp.ne.s32.totalorder %s23, %s39
    %p41 = scmp.eq.s32.totalorder %s15, 0
    %p42 = por %p40, %p41
    %s44 = sadd.s32 %s43, 1
    %p47 = scmp.eq.s32.totalorder %s9, 1
    %p48 = scmp.ne.s32.totalorder %s43, %s45
    %p49 = scmp.eq.s32.totalorder %s9, 0
    %p50 = por %p48, %p49
    %p51 = scmp.ne.s32.totalorder %s43, %s45
    %p52 = scmp.eq.s32.totalorder %s14, 1
    %p53 = por %p51, %p52
    %p54 = scmp.ne.s32.totalorder %s45, %s46
    %p55 = scmp.eq.s32.totalorder %s14, 0
    %p56 = por %p54, %p55
    %p57 = scmp.ne.s32.totalorder %s45, %s46
    %p58 = scmp.eq.s32.totalorder %s15, 1
    %p59 = por %p57, %p58
    %p61 = scmp.ne.s32.totalorder %s46, %s60
    %p62 = scmp.eq.s32.totalorder %s15, 0
    %p63 = por %p61, %p62
    %s65 = sadd.s32 %s64, 1
    %p68 = scmp.eq.s32.totalorder %s9, 1
    %p69 = scmp.ne.s32.totalorder %s64, %s66
    %p70 = scmp.eq.s32.totalorder %s9, 0
    %p71 = por %p69, %p70
    %p72 = scmp.ne.s32.totalorder %s64, %s66
    %p73 = scmp.eq.s32.totalorder %s14, 1
    %p74 = por %p72, %p73
    %p75 = scmp.ne.s32.totalorder %s66, %s67
    %p76 = scmp.eq.s32.totalorder %s14, 0
    %p77 = por %p75, %p76
    %p78 = scmp.ne.s32.totalorder %s66, %s67
    %p79 = scmp.eq.s32.totalorder %s15, 1
    %p80 = por %p78, %p79
    %p82 = scmp.ne.s32.totalorder %s67, %s81
    %p83 = scmp.eq.s32.totalorder %s15, 0
    %p84 = por %p82, %p83
    %s85 = ssub.s32 %s9, %s16
    %p86 = scmp.eq.s32.totalorder %s85, 0
    %s88 = sadd.s32 %s87, 1
    %s89 = scalar_select %p86, %s87, %s88
    %p92 = pneg %p86
    %p93 = scmp.eq.s32.totalorder %s9, 1
    %p94 = por %p92, %p93
    %p95 = scmp.ne.s32.totalorder %s87, %s90
    %p96 = scmp.eq.s32.totalorder %s9, 0
    %p97 = por %p95, %p96
    %p98 = scmp.ne.s32.totalorder %s87, %s90
    %p99 = scmp.eq.s32.totalorder %s14, 1
    %p100 = por %p98, %p99
    %p101 = scmp.ne.s32.totalorder %s90, %s91
    %p102 = scmp.eq.s32.totalorder %s14, 0
    %p103 = por %p101, %p102
    %p104 = scmp.ne.s32.totalorder %s90, %s91
    %p105 = scmp.eq.s32.totalorder %s15, 1
    %p106 = por %p104, %p105
    %p108 = scmp.ne.s32.totalorder %s91, %s107
    %p109 = scmp.eq.s32.totalorder %s15, 0
    %p110 = por %p108, %p109
    %p111 = scmp.le.s32.totalorder 1, %s9
    %p112 = scmp.lt.s32.totalorder %s9, 3
    %p113 = pnand %p111, %p112
    %p114 = pneg %p113
    // Predicated region
    $region9: #{lora_conv_forward.1} parent=5 // pred_check
      _
    $region10: #{lora_conv_forward.1} parent=5 // pred_check_branch
      %116 = sbr.rel (%p113) target = $region12
    $region11: #{lora_conv_forward.1} parent=5 // pred_region
      %s117 = ssub.s32 %s9, 1
      // Predicated region
      $region13: #{lora_conv_forward.1} parent=11 // pred_check
        %p118 = pneg %p56
      $region14: #{lora_conv_forward.1} parent=11 // pred_check_branch
        %120 = sbr.rel (%p118) target = $region16
      $region15: #{lora_conv_forward.1} parent=11 // pred_region
        _
      $region16: #{lora_conv_forward.1} parent=11 // pred_fallthru
        _
      // Predicated region
      $region17: #{lora_conv_forward.1} parent=11 // pred_check
        %p121 = pneg %p77
      $region18: #{lora_conv_forward.1} parent=11 // pred_check_branch
        %123 = sbr.rel (%p121) target = $region20
      $region19: #{lora_conv_forward.1} parent=11 // pred_region
        _
      $region20: #{lora_conv_forward.1} parent=11 // pred_fallthru
        _
    $region12: #{lora_conv_forward.1} parent=5 // pred_fallthru
      _
    %p124 = scmp.lt.s32.totalorder %s9, 2
    // Predicated region
    $region21: #{lora_conv_forward.1} parent=5 // pred_check
      %p125 = pneg %p124
    $region22: #{lora_conv_forward.1} parent=5 // pred_check_branch
      %127 = sbr.rel (%p125) target = $region24
    $region23: #{lora_conv_forward.1} parent=5 // pred_region
      // Predicated region
      $region25: #{lora_conv_forward.1} parent=23 // pred_check
        %p128 = pneg %p29
      $region26: #{lora_conv_forward.1} parent=23 // pred_check_branch
        %130 = sbr.rel (%p128) target = $region28
      $region27: #{lora_conv_forward.1} parent=23 // pred_region
        %p131 = scmp.lt.s32.totalorder %s9, 1
        %s132 = scalar_select %p131, %s9, 1
        %s133 = smul.addr %s132, 33
        %s134 = smul.addr %s133, 4
        %s135 = scalar_lea.vmem %s0, %s134
      $region28: #{lora_conv_forward.1} parent=23 // pred_fallthru
        _
    $region24: #{lora_conv_forward.1} parent=5 // pred_fallthru
      _
    %p136 = scmp.le.s32.totalorder 1, %s9
    %p137 = scmp.lt.s32.totalorder %s9, 3
    %p138 = pnand %p136, %p137
    %p139 = pneg %p138
    // Predicated region
    $region29: #{lora_conv_forward.1} parent=5 // pred_check
      _
    $region30: #{lora_conv_forward.1} parent=5 // pred_check_branch
      %141 = sbr.rel (%p138) target = $region32
    $region31: #{lora_conv_forward.1} parent=5 // pred_region
      %s142 = ssub.s32 %s9, 1
      %p143 = scmp.lt.s32.totalorder %s14, 1
      %s144 = scalar_select %p143, %s14, 1
      %s145 = smul.addr %s144, 33
      %s146 = smul.addr %s145, 4
      %s147 = scalar_lea.vmem %s0, %s146
      %p148 = pneg %p35
      %p149 = pneg %p32
      %p150 = pneg %p56
      %p151 = pneg %p53
      %p152 = pneg %p77
      %p153 = pneg %p74
      %p154 = pneg %p103
      %p155 = pneg %p100
      %p156 = scmp.lt.s32.totalorder %s14, 1
      %s157 = scalar_select %p156, %s14, 1
      %s158 = smul.addr %s157, 28
      %s159 = smul.addr %s158, 8
      %s160 = scalar_lea.vmem %s3, %s159
      %p161 = scmp.lt.s32.totalorder %s14, 1
      %s162 = scalar_select %p161, %s14, 1
      %s163 = smul.addr %s162, 33
      %s164 = smul.addr %s163, 4
      %s165 = scalar_lea.vmem %s0, %s164
      %p166 = scmp.lt.s32.totalorder %s14, 1
      %s167 = scalar_select %p166, %s14, 1
      %s168 = smul.addr %s167, 28
      %s169 = smul.addr %s168, 8
      %s170 = scalar_lea.vmem %s3, %s169
      %v172 = vld [vmem:[%s165] sm:$0xf]
      %v173 = vld [vmem:[%s165 + $0x4] sm:$0xf]
      %v174 = vld [vmem:[%s165 + $0x8] sm:$0xf]
      %v175 = vld [vmem:[%s165 + $0xc] sm:$0xf]
      %v176 = vld [vmem:[%s165 + $0x10] sm:$0xf]
      %v177 = vld [vmem:[%s165 + $0x14] sm:$0xf]
      %v178 = vld [vmem:[%s165 + $0x18] sm:$0xf]
      %v179 = vld [vmem:[%s165 + $0x1c] sm:$0xf]
      %v180 = vld [vmem:[%s165 + $0x20] sm:$0xf]
      %v181 = vld [vmem:[%s165 + $0x24] sm:$0xf]
      %v182 = vld [vmem:[%s165 + $0x28] sm:$0xf]
      %v183 = vld [vmem:[%s165 + $0x2c] sm:$0xf]
      %v184 = vld [vmem:[%s165 + $0x30] sm:$0xf]
      %v185 = vld [vmem:[%s165 + $0x34] sm:$0xf]
      %v186 = vld [vmem:[%s165 + $0x38] sm:$0xf]
      %v187 = vld [vmem:[%s165 + $0x3c] sm:$0xf]
      %v188 = vld [vmem:[%s165 + $0x40] sm:$0xf]
      %v189 = vld [vmem:[%s165 + $0x44] sm:$0xf]
      %v190 = vld [vmem:[%s165 + $0x48] sm:$0xf]
      %v191 = vld [vmem:[%s165 + $0x4c] sm:$0xf]
      %v192 = vld [vmem:[%s165 + $0x50] sm:$0xf]
      %v193 = vld [vmem:[%s165 + $0x54] sm:$0xf]
      %v194 = vld [vmem:[%s165 + $0x58] sm:$0xf]
      %v195 = vld [vmem:[%s165 + $0x5c] sm:$0xf]
      %v196 = vld [vmem:[%s165 + $0x60] sm:$0xf]
      %v197 = vld [vmem:[%s165 + $0x64] sm:$0xf]
      %v198 = vld [vmem:[%s165 + $0x68] sm:$0xf]
      %v199 = vld [vmem:[%s165 + $0x6c] sm:$0xf]
      %v200 = vld [vmem:[%s165 + $0x70] sm:$0xf]
      %v201 = vld [vmem:[%s165 + $0x74] sm:$0xf]
      %v202 = vld [vmem:[%s165 + $0x78] sm:$0xf]
      %v203 = vld [vmem:[%s165 + $0x7c] sm:$0xf]
      %v204 = vld [vmem:[%s165 + $0x80] sm:$0xf]
      %v205 = vld [vmem:[%s1] sm:$0x3]
      %v206 = vld [vmem:[%s1 + $0x2] sm:$0x3]
      %v207 = vld [vmem:[%s1 + $0x4] sm:$0x3]
      %v208 = vld [vmem:[%s1 + $0x6] sm:$0x3]
      %v209 = vld [vmem:[%s1 + $0x8] sm:$0x3]
      %v210 = vld [vmem:[%s1 + $0xa] sm:$0x3]
      %v211 = vld [vmem:[%s1 + $0xc] sm:$0x3]
      %v212 = vld [vmem:[%s1 + $0xe] sm:$0x3]
      %v213 = vld [vmem:[%s1 + $0x10] sm:$0x3]
      %v243 = vunpack.c.l.b16 %v172
      %v244 = vunpack.c.l.b16 %v173
      %v245 = vunpack.c.l.b16 %v174
      %v246 = vunpack.c.l.b16 %v175
      %v247 = vunpack.c.l.b16 %v176
      %v248 = vunpack.c.l.b16 %v177
      %v249 = vunpack.c.l.b16 %v178
      %v250 = vunpack.c.l.b16 %v179
      %v251 = vunpack.c.l.b16 %v180
      %v252 = vunpack.c.l.b16 %v181
      %v253 = vunpack.c.l.b16 %v182
      %v254 = vunpack.c.l.b16 %v183
      %v255 = vunpack.c.l.b16 %v184
      %v256 = vunpack.c.l.b16 %v185
      %v257 = vunpack.c.l.b16 %v186
      %v258 = vunpack.c.l.b16 %v187
      %v259 = vunpack.c.l.b16 %v188
      %v260 = vunpack.c.l.b16 %v189
      %v261 = vunpack.c.l.b16 %v190
      %v262 = vunpack.c.l.b16 %v191
      %v263 = vunpack.c.l.b16 %v192
      %v264 = vunpack.c.l.b16 %v193
      %v265 = vunpack.c.l.b16 %v194
      %v266 = vunpack.c.l.b16 %v195
      %v267 = vunpack.c.l.b16 %v196
      %v268 = vunpack.c.l.b16 %v197
      %v269 = vunpack.c.l.b16 %v198
      %v270 = vunpack.c.l.b16 %v199
      %v271 = vunpack.c.l.b16 %v200
      %v272 = vpack.c.b16 %v244, %v243
      %v273 = vpack.c.b16 %v246, %v245
      %v274 = vpack.c.b16 %v248, %v247
      %v275 = vpack.c.b16 %v250, %v249
      %v276 = vpack.c.b16 %v252, %v251
      %v277 = vpack.c.b16 %v254, %v253
      %v278 = vpack.c.b16 %v256, %v255
      %v279 = vpack.c.b16 %v258, %v257
      %v280 = vpack.c.b16 %v260, %v259
      %v281 = vpack.c.b16 %v262, %v261
      %v282 = vpack.c.b16 %v264, %v263
      %v283 = vpack.c.b16 %v266, %v265
      %v284 = vpack.c.b16 %v268, %v267
      %v285 = vpack.c.b16 %v270, %v269
      %v286 = vpack.c.b16 %v271, %v271
      %vm287 = vsmask.f32 7424
      %v289 = vshrl.u32 %v272, 16
      %v291 = vshll.u32 %v272, 16
      %v293 = vrot.slane %v291, 1
      %v294 = vor.u32 %v289, %v293
      %v296 = vshll.u32 %v273, 16
      %v298 = vrot.slane %v296, 1
      %v299 = vsel %vm287, %v294, %v298
      %v300 = vshrl.u32 %v273, 16
      %v302 = vor.u32 %v300, %v298
      %v304 = vshll.u32 %v274, 16
      %v306 = vrot.slane %v304, 1
      %v307 = vsel %vm287, %v302, %v306
      %v308 = vshrl.u32 %v274, 16
      %v310 = vor.u32 %v308, %v306
      %v312 = vshll.u32 %v275, 16
      %v314 = vrot.slane %v312, 1
      %v315 = vsel %vm287, %v310, %v314
      %v316 = vshrl.u32 %v275, 16
      %v318 = vor.u32 %v316, %v314
      %v320 = vshll.u32 %v276, 16
      %v322 = vrot.slane %v320, 1
      %v323 = vsel %vm287, %v318, %v322
      %v324 = vshrl.u32 %v276, 16
      %v326 = vor.u32 %v324, %v322
      %v328 = vshll.u32 %v277, 16
      %v330 = vrot.slane %v328, 1
      %v331 = vsel %vm287, %v326, %v330
      %v332 = vshrl.u32 %v277, 16
      %v334 = vor.u32 %v332, %v330
      %v336 = vshll.u32 %v278, 16
      %v338 = vrot.slane %v336, 1
      %v339 = vsel %vm287, %v334, %v338
      %v340 = vshrl.u32 %v278, 16
      %v342 = vor.u32 %v340, %v338
      %v344 = vshll.u32 %v279, 16
      %v346 = vrot.slane %v344, 1
      %v347 = vsel %vm287, %v342, %v346
      %v348 = vshrl.u32 %v279, 16
      %v350 = vor.u32 %v348, %v346
      %v352 = vshll.u32 %v280, 16
      %v354 = vrot.slane %v352, 1
      %v355 = vsel %vm287, %v350, %v354
      %v356 = vshrl.u32 %v280, 16
      %v358 = vor.u32 %v356, %v354
      %v360 = vshll.u32 %v281, 16
      %v362 = vrot.slane %v360, 1
      %v363 = vsel %vm287, %v358, %v362
      %v364 = vshrl.u32 %v281, 16
      %v366 = vor.u32 %v364, %v362
      %v368 = vshll.u32 %v282, 16
      %v370 = vrot.slane %v368, 1
      %v371 = vsel %vm287, %v366, %v370
      %v372 = vshrl.u32 %v282, 16
      %v374 = vor.u32 %v372, %v370
      %v376 = vshll.u32 %v283, 16
      %v378 = vrot.slane %v376, 1
      %v379 = vsel %vm287, %v374, %v378
      %v380 = vshrl.u32 %v283, 16
      %v382 = vor.u32 %v380, %v378
      %v384 = vshll.u32 %v284, 16
      %v386 = vrot.slane %v384, 1
      %v387 = vsel %vm287, %v382, %v386
      %v388 = vshrl.u32 %v284, 16
      %v390 = vor.u32 %v388, %v386
      %v392 = vshll.u32 %v285, 16
      %v394 = vrot.slane %v392, 1
      %v395 = vsel %vm287, %v390, %v394
      %v396 = vshrl.u32 %v285, 16
      %v398 = vor.u32 %v396, %v394
      %v400 = vshll.u32 %v286, 16
      %v402 = vrot.slane %v400, 1
      %v403 = vsel %vm287, %v398, %v402
      %vm404 = vcmask 31744
      %v406 = vsel %vm404, %v299, 0
      %v409 = vsel %vm404, %v307, 0
      %v412 = vsel %vm404, %v315, 0
      %v415 = vsel %vm404, %v323, 0
      %v418 = vsel %vm404, %v331, 0
      %v421 = vsel %vm404, %v339, 0
      %v424 = vsel %vm404, %v347, 0
      %v427 = vsel %vm404, %v355, 0
      %v430 = vsel %vm404, %v363, 0
      %v433 = vsel %vm404, %v371, 0
      %v436 = vsel %vm404, %v379, 0
      %v439 = vsel %vm404, %v387, 0
      %v442 = vsel %vm404, %v395, 0
      %v445 = vsel %vm404, %v403, 0
      %vm447 = vcmask 1041408
      %v449 = vsel %vm447, %v206, 0
      %451 = vmatprep.subr.bf16.mxu0 0
      %452 = vmatpush1.bf16.msra.mxu0 %v449
      %453 = vmatprep.subr.bf16.mxu0 0
      %454 = vmatpush1.bf16.msra.mxu0 0
      %455 = vmatprep.subr.bf16.mxu0 0
      %456 = vmatpush1.bf16.msra.mxu0 0
      %457 = vmatprep.subr.bf16.mxu0 0
      %458 = vmatpush1.bf16.msra.mxu0 0
      %459 = vmatprep.subr.bf16.mxu0 0
      %460 = vmatpush1.bf16.msra.mxu0 0
      %461 = vmatprep.subr.bf16.mxu0 0
      %462 = vmatpush1.bf16.msra.mxu0 0
      %463 = vmatprep.subr.bf16.mxu0 0
      %464 = vmatpush1.bf16.msra.mxu0 0
      %465 = vmatprep.subr.bf16.mxu0 0
      %466 = vmatpush1.bf16.msra.mxu0 0
      %467 = vmatprep.subr.bf16.mxu0 0
      %468 = vmatpush1.bf16.msra.mxu0 0
      %469 = vmatprep.subr.bf16.mxu0 0
      %470 = vmatpush1.bf16.msra.mxu0 0
      %471 = vmatprep.subr.bf16.mxu0 0
      %472 = vmatpush1.bf16.msra.mxu0 0
      %473 = vmatprep.subr.bf16.mxu0 0
      %474 = vmatpush1.bf16.msra.mxu0 0
      %475 = vmatprep.subr.bf16.mxu0 0
      %476 = vmatpush1.bf16.msra.mxu0 0
      %477 = vmatprep.subr.bf16.mxu0 0
      %478 = vmatpush1.bf16.msra.mxu0 0
      %479 = vmatprep.subr.bf16.mxu0 0
      %480 = vmatpush1.bf16.msra.mxu0 0
      %481 = vmatprep.subr.bf16.mxu0 0
      %482 = vmatpush1.bf16.msra.mxu0 0
      %483 = vmatprep.mubr.bf16.mxu0 0
      %484 = vmatmul.mubr.bf16.gmra.mrb[0].mxu0 %v406
      %v485 = vpop.f32.mrb[0].mxu0
      %v486 = vadd.f32 0.0, %v485
      %v487 = vpop.f32.mrb[0].mxu0
      %v488 = vpop.f32.mrb[0].mxu0
      %v489 = vadd.f32 0.0, %v488
      %v490 = vpop.f32.mrb[0].mxu0
      %491 = vmatprep.mubr.bf16.mxu0 0
      %492 = vmatmul.mubr.bf16.gmra.mrb[0].mxu0 %v409
      %v493 = vpop.f32.mrb[0].mxu0
      %v494 = vadd.f32 0.0, %v493
      %v495 = vpop.f32.mrb[0].mxu0
      %v496 = vpop.f32.mrb[0].mxu0
      %v497 = vadd.f32 0.0, %v496
      %v498 = vpop.f32.mrb[0].mxu0
      %499 = vmatprep.mubr.bf16.mxu0 0
      %500 = vmatmul.mubr.bf16.gmra.mrb[0].mxu0 %v412
      %v501 = vpop.f32.mrb[0].mxu0
      %v502 = vadd.f32 0.0, %v501
      %v503 = vpop.f32.mrb[0].mxu0
      %v504 = vpop.f32.mrb[0].mxu0
      %v505 = vadd.f32 0.0, %v504
      %v506 = vpop.f32.mrb[0].mxu0
      %507 = vmatprep.mubr.bf16.mxu0 0
      %508 = vmatmul.mubr.bf16.gmra.mrb[0].mxu0 %v415
      %v509 = vpop.f32.mrb[0].mxu0
      %v510 = vadd.f32 0.0, %v509
      %v511 = vpop.f32.mrb[0].mxu0
      %v512 = vpop.f32.mrb[0].mxu0
      %v513 = vadd.f32 0.0, %v512
      %v514 = vpop.f32.mrb[0].mxu0
      %515 = vmatprep.mubr.bf16.mxu0 0
      %516 = vmatmul.mubr.bf16.gmra.mrb[0].mxu0 %v418
      %v517 = vpop.f32.mrb[0].mxu0
      %v518 = vadd.f32 0.0, %v517
      %v519 = vpop.f32.mrb[0].mxu0
      %v520 = vpop.f32.mrb[0].mxu0
      %v521 = vadd.f32 0.0, %v520
      %v522 = vpop.f32.mrb[0].mxu0
      %523 = vmatprep.mubr.bf16.mxu0 0
      %524 = vmatmul.mubr.bf16.gmra.mrb[0].mxu0 %v421
      %v525 = vpop.f32.mrb[0].mxu0
      %v526 = vadd.f32 0.0, %v525
      %v527 = vpop.f32.mrb[0].mxu0
      %v528 = vpop.f32.mrb[0].mxu0
      %v529 = vadd.f32 0.0, %v528
      %v530 = vpop.f32.mrb[0].mxu0
      %531 = vmatprep.mubr.bf16.mxu0 0
      %532 = vmatmul.mubr.bf16.gmra.mrb[0].mxu0 %v424
      %v533 = vpop.f32.mrb[0].mxu0
      %v534 = vadd.f32 0.0, %v533
      %v535 = vpop.f32.mrb[0].mxu0
      %v536 = vpop.f32.mrb[0].mxu0
      %v537 = vadd.f32 0.0, %v536
      %v538 = vpop.f32.mrb[0].mxu0
      %539 = vmatprep.mubr.bf16.mxu0 0
      %540 = vmatmul.mubr.bf16.gmra.mrb[0].mxu0 %v427
      %v541 = vpop.f32.mrb[0].mxu0
      %v542 = vadd.f32 0.0, %v541
      %v543 = vpop.f32.mrb[0].mxu0
      %v544 = vpop.f32.mrb[0].mxu0
      %v545 = vadd.f32 0.0, %v544
      %v546 = vpop.f32.mrb[0].mxu0
      %547 = vmatprep.mubr.bf16.mxu0 0
      %548 = vmatmul.mubr.bf16.gmra.mrb[0].mxu0 %v430
      %v549 = vpop.f32.mrb[0].mxu0
      %v550 = vadd.f32 0.0, %v549
      %v551 = vpop.f32.mrb[0].mxu0
      %v552 = vpop.f32.mrb[0].mxu0
      %v553 = vadd.f32 0.0, %v552
      %v554 = vpop.f32.mrb[0].mxu0
      %555 = vmatprep.mubr.bf16.mxu0 0
      %556 = vmatmul.mubr.bf16.gmra.mrb[0].mxu0 %v433
      %v557 = vpop.f32.mrb[0].mxu0
      %v558 = vadd.f32 0.0, %v557
      %v559 = vpop.f32.mrb[0].mxu0
      %v560 = vpop.f32.mrb[0].mxu0
      %v561 = vadd.f32 0.0, %v560
      %v562 = vpop.f32.mrb[0].mxu0
      %563 = vmatprep.mubr.bf16.mxu0 0
      %564 = vmatmul.mubr.bf16.gmra.mrb[0].mxu0 %v436
      %v565 = vpop.f32.mrb[0].mxu0
      %v566 = vadd.f32 0.0, %v565
      %v567 = vpop.f32.mrb[0].mxu0
      %v568 = vpop.f32.mrb[0].mxu0
      %v569 = vadd.f32 0.0, %v568
      %v570 = vpop.f32.mrb[0].mxu0
      %571 = vmatprep.mubr.bf16.mxu0 0
      %572 = vmatmul.mubr.bf16.gmra.mrb[0].mxu0 %v439
      %v573 = vpop.f32.mrb[0].mxu0
      %v574 = vadd.f32 0.0, %v573
      %v575 = vpop.f32.mrb[0].mxu0
      %v576 = vpop.f32.mrb[0].mxu0
      %v577 = vadd.f32 0.0, %v576
      %v578 = vpop.f32.mrb[0].mxu0
      %579 = vmatprep.mubr.bf16.mxu0 0
      %580 = vmatmul.mubr.bf16.gmra.mrb[0].mxu0 %v442
      %v581 = vpop.f32.mrb[0].mxu0
      %v582 = vadd.f32 0.0, %v581
      %v583 = vpop.f32.mrb[0].mxu0
      %v584 = vpop.f32.mrb[0].mxu0
      %v585 = vadd.f32 0.0, %v584
      %v586 = vpop.f32.mrb[0].mxu0
      %587 = vmatprep.mubr.bf16.mxu0 0
      %588 = vmatmul.mubr.bf16.gmra.mrb[0].mxu0 %v445
      %v589 = vpop.f32.mrb[0].mxu0
      %v590 = vadd.f32 0.0, %v589
      %v591 = vpop.f32.mrb[0].mxu0
      %v592 = vpop.f32.mrb[0].mxu0
      %v593 = vadd.f32 0.0, %v592
      %v594 = vpop.f32.mrb[0].mxu0
      %595 = vdwg.mxu0
      %v596 = vsel %vm404, %v272, 0
      %v598 = vsel %vm404, %v273, 0
      %v600 = vsel %vm404, %v274, 0
      %v602 = vsel %vm404, %v275, 0
      %v604 = vsel %vm404, %v276, 0
      %v606 = vsel %vm404, %v277, 0
      %v608 = vsel %vm404, %v278, 0
      %v610 = vsel %vm404, %v279, 0
      %v612 = vsel %vm404, %v280, 0
      %v614 = vsel %vm404, %v281, 0
      %v616 = vsel %vm404, %v282, 0
      %v618 = vsel %vm404, %v283, 0
      %v620 = vsel %vm404, %v284, 0
      %v622 = vsel %vm404, %v285, 0
      %v625 = vsel %vm447, %v205, 0
      %627 = vmatprep.subr.bf16.mxu0 0
      %628 = vmatpush1.bf16.msra.mxu0 %v625
      %629 = vmatprep.subr.bf16.mxu0 0
      %630 = vmatpush1.bf16.msra.mxu0 0
      %631 = vmatprep.subr.bf16.mxu0 0
      %632 = vmatpush1.bf16.msra.mxu0 0
      %633 = vmatprep.subr.bf16.mxu0 0
      %634 = vmatpush1.bf16.msra.mxu0 0
      %635 = vmatprep.subr.bf16.mxu0 0
      %636 = vmatpush1.bf16.msra.mxu0 0
      %637 = vmatprep.subr.bf16.mxu0 0
      %638 = vmatpush1.bf16.msra.mxu0 0
      %639 = vmatprep.subr.bf16.mxu0 0
      %640 = vmatpush1.bf16.msra.mxu0 0
      %641 = vmatprep.subr.bf16.mxu0 0
      %642 = vmatpush1.bf16.msra.mxu0 0
      %643 = vmatprep.subr.bf16.mxu0 0
      %644 = vmatpush1.bf16.msra.mxu0 0
      %645 = vmatprep.subr.bf16.mxu0 0
      %646 = vmatpush1.bf16.msra.mxu0 0
      %647 = vmatprep.subr.bf16.mxu0 0
      %648 = vmatpush1.bf16.msra.mxu0 0
      %649 = vmatprep.subr.bf16.mxu0 0
      %650 = vmatpush1.bf16.msra.mxu0 0
      %651 = vmatprep.subr.bf16.mxu0 0
      %652 = vmatpush1.bf16.msra.mxu0 0
      %653 = vmatprep.subr.bf16.mxu0 0
      %654 = vmatpush1.bf16.msra.mxu0 0
      %655 = vmatprep.subr.bf16.mxu0 0
      %656 = vmatpush1.bf16.msra.mxu0 0
      %657 = vmatprep.subr.bf16.mxu0 0
      %658 = vmatpush1.bf16.msra.mxu0 0
      %659 = vmatprep.mubr.bf16.mxu0 0
      %660 = vmatmul.mubr.bf16.gmra.mrb[0].mxu0 %v596
      %v661 = vpop.f32.mrb[0].mxu0
      %v662 = vadd.f32 %v486, %v661
      %v663 = vpop.f32.mrb[0].mxu0
      %v664 = vpop.f32.mrb[0].mxu0
      %v665 = vadd.f32 %v489, %v664
      %v666 = vpop.f32.mrb[0].mxu0
      %667 = vmatprep.mubr.bf16.mxu0 0
      %668 = vmatmul.mubr.bf16.gmra.mrb[0].mxu0 %v598
      %v669 = vpop.f32.mrb[0].mxu0
      %v670 = vadd.f32 %v494, %v669
      %v671 = vpop.f32.mrb[0].mxu0
      %v672 = vpop.f32.mrb[0].mxu0
      %v673 = vadd.f32 %v497, %v672
      %v674 = vpop.f32.mrb[0].mxu0
      %675 = vmatprep.mubr.bf16.mxu0 0
      %676 = vmatmul.mubr.bf16.gmra.mrb[0].mxu0 %v600
      %v677 = vpop.f32.mrb[0].mxu0
      %v678 = vadd.f32 %v502, %v677
      %v679 = vpop.f32.mrb[0].mxu0
      %v680 = vpop.f32.mrb[0].mxu0
      %v681 = vadd.f32 %v505, %v680
      %v682 = vpop.f32.mrb[0].mxu0
      %683 = vmatprep.mubr.bf16.mxu0 0
      %684 = vmatmul.mubr.bf16.gmra.mrb[0].mxu0 %v602
      %v685 = vpop.f32.mrb[0].mxu0
      %v686 = vadd.f32 %v510, %v685
      %v687 = vpop.f32.mrb[0].mxu0
      %v688 = vpop.f32.mrb[0].mxu0
      %v689 = vadd.f32 %v513, %v688
      %v690 = vpop.f32.mrb[0].mxu0
      %691 = vmatprep.mubr.bf16.mxu0 0
      %692 = vmatmul.mubr.bf16.gmra.mrb[0].mxu0 %v604
      %v693 = vpop.f32.mrb[0].mxu0
      %v694 = vadd.f32 %v518, %v693
      %v695 = vpop.f32.mrb[0].mxu0
      %v696 = vpop.f32.mrb[0].mxu0
      %v697 = vadd.f32 %v521, %v696
      %v698 = vpop.f32.mrb[0].mxu0
      %699 = vmatprep.mubr.bf16.mxu0 0
      %700 = vmatmul.mubr.bf16.gmra.mrb[0].mxu0 %v606
      %v701 = vpop.f32.mrb[0].mxu0
      %v702 = vadd.f32 %v526, %v701
      %v703 = vpop.f32.mrb[0].mxu0
      %v704 = vpop.f32.mrb[0].mxu0
      %v705 = vadd.f32 %v529, %v704
      %v706 = vpop.f32.mrb[0].mxu0
      %707 = vmatprep.mubr.bf16.mxu0 0
      %708 = vmatmul.mubr.bf16.gmra.mrb[0].mxu0 %v608
      %v709 = vpop.f32.mrb[0].mxu0
      %v710 = vadd.f32 %v534, %v709
      %v711 = vpop.f32.mrb[0].mxu0
      %v712 = vpop.f32.mrb[0].mxu0
      %v713 = vadd.f32 %v537, %v712
      %v714 = vpop.f32.mrb[0].mxu0
      %715 = vmatprep.mubr.bf16.mxu0 0
      %716 = vmatmul.mubr.bf16.gmra.mrb[0].mxu0 %v610
      %v717 = vpop.f32.mrb[0].mxu0
      %v718 = vadd.f32 %v542, %v717
      %v719 = vpop.f32.mrb[0].mxu0
      %v720 = vpop.f32.mrb[0].mxu0
      %v721 = vadd.f32 %v545, %v720
      %v722 = vpop.f32.mrb[0].mxu0
      %723 = vmatprep.mubr.bf16.mxu0 0
      %724 = vmatmul.mubr.bf16.gmra.mrb[0].mxu0 %v612
      %v725 = vpop.f32.mrb[0].mxu0
      %v726 = vadd.f32 %v550, %v725
      %v727 = vpop.f32.mrb[0].mxu0
      %v728 = vpop.f32.mrb[0].mxu0
      %v729 = vadd.f32 %v553, %v728
      %v730 = vpop.f32.mrb[0].mxu0
      %731 = vmatprep.mubr.bf16.mxu0 0
      %732 = vmatmul.mubr.bf16.gmra.mrb[0].mxu0 %v614
      %v733 = vpop.f32.mrb[0].mxu0
      %v734 = vadd.f32 %v558, %v733
      %v735 = vpop.f32.mrb[0].mxu0
      %v736 = vpop.f32.mrb[0].mxu0
      %v737 = vadd.f32 %v561, %v736
      %v738 = vpop.f32.mrb[0].mxu0
      %739 = vmatprep.mubr.bf16.mxu0 0
      %740 = vmatmul.mubr.bf16.gmra.mrb[0].mxu0 %v616
      %v741 = vpop.f32.mrb[0].mxu0
      %v742 = vadd.f32 %v566, %v741
      %v743 = vpop.f32.mrb[0].mxu0
      %v744 = vpop.f32.mrb[0].mxu0
      %v745 = vadd.f32 %v569, %v744
      %v746 = vpop.f32.mrb[0].mxu0
      %747 = vmatprep.mubr.bf16.mxu0 0
      %748 = vmatmul.mubr.bf16.gmra.mrb[0].mxu0 %v618
      %v749 = vpop.f32.mrb[0].mxu0
      %v750 = vadd.f32 %v574, %v749
      %v751 = vpop.f32.mrb[0].mxu0
      %v752 = vpop.f32.mrb[0].mxu0
      %v753 = vadd.f32 %v577, %v752
      %v754 = vpop.f32.mrb[0].mxu0
      %755 = vmatprep.mubr.bf16.mxu0 0
      %756 = vmatmul.mubr.bf16.gmra.mrb[0].mxu0 %v620
      %v757 = vpop.f32.mrb[0].mxu0
      %v758 = vadd.f32 %v582, %v757
      %v759 = vpop.f32.mrb[0].mxu0
      %v760 = vpop.f32.mrb[0].mxu0
      %v761 = vadd.f32 %v585, %v760
      %v762 = vpop.f32.mrb[0].mxu0
      %763 = vmatprep.mubr.bf16.mxu0 0
      %764 = vmatmul.mubr.bf16.gmra.mrb[0].mxu0 %v622
      %v765 = vpop.f32.mrb[0].mxu0
      %v766 = vadd.f32 %v590, %v765
      %v767 = vpop.f32.mrb[0].mxu0
      %v768 = vpop.f32.mrb[0].mxu0
      %v769 = vadd.f32 %v593, %v768
      %v770 = vpop.f32.mrb[0].mxu0
      %771 = vdwg.mxu0
      %vm772 = vcmask 1046528
      %v773 = vrot.slane %v272, 1
      %v774 = vrot.slane %v273, 1
      %v775 = vsel %vm772, %v773, %v774
      %v776 = vrot.slane %v274, 1
      %v777 = vsel %vm772, %v774, %v776
      %v778 = vrot.slane %v275, 1
      %v779 = vsel %vm772, %v776, %v778
      %v780 = vrot.slane %v276, 1
      %v781 = vsel %vm772, %v778, %v780
      %v782 = vrot.slane %v277, 1
      %v783 = vsel %vm772, %v780, %v782
      %v784 = vrot.slane %v278, 1
      %v785 = vsel %vm772, %v782, %v784
      %v786 = vrot.slane %v279, 1
      %v787 = vsel %vm772, %v784, %v786
      %v788 = vrot.slane %v280, 1
      %v789 = vsel %vm772, %v786, %v788
      %v790 = vrot.slane %v281, 1
      %v791 = vsel %vm772, %v788, %v790
      %v792 = vrot.slane %v282, 1
      %v793 = vsel %vm772, %v790, %v792
      %v794 = vrot.slane %v283, 1
      %v795 = vsel %vm772, %v792, %v794
      %v796 = vrot.slane %v284, 1
      %v797 = vsel %vm772, %v794, %v796
      %v798 = vrot.slane %v285, 1
      %v799 = vsel %vm772, %v796, %v798
      %v800 = vrot.slane %v286, 1
      %v801 = vsel %vm772, %v798, %v800
      %v803 = vsel %vm404, %v775, 0
      %v806 = vsel %vm404, %v777, 0
      %v809 = vsel %vm404, %v779, 0
      %v812 = vsel %vm404, %v781, 0
      %v815 = vsel %vm404, %v783, 0
      %v818 = vsel %vm404, %v785, 0
      %v821 = vsel %vm404, %v787, 0
      %v824 = vsel %vm404, %v789, 0
      %v827 = vsel %vm404, %v791, 0
      %v830 = vsel %vm404, %v793, 0
      %v833 = vsel %vm404, %v795, 0
      %v836 = vsel %vm404, %v797, 0
      %v839 = vsel %vm404, %v799, 0
      %v842 = vsel %vm404, %v801, 0
      %v845 = vsel %vm447, %v207, 0
      %847 = vmatprep.subr.bf16.mxu0 0
      %848 = vmatpush1.bf16.msra.mxu0 %v845
      %849 = vmatprep.subr.bf16.mxu0 0
      %850 = vmatpush1.bf16.msra.mxu0 0
      %851 = vmatprep.subr.bf16.mxu0 0
      %852 = vmatpush1.bf16.msra.mxu0 0
      %853 = vmatprep.subr.bf16.mxu0 0
      %854 = vmatpush1.bf16.msra.mxu0 0
      %855 = vmatprep.subr.bf16.mxu0 0
      %856 = vmatpush1.bf16.msra.mxu0 0
      %857 = vmatprep.subr.bf16.mxu0 0
      %858 = vmatpush1.bf16.msra.mxu0 0
      %859 = vmatprep.subr.bf16.mxu0 0
      %860 = vmatpush1.bf16.msra.mxu0 0
      %861 = vmatprep.subr.bf16.mxu0 0
      %862 = vmatpush1.bf16.msra.mxu0 0
      %863 = vmatprep.subr.bf16.mxu0 0
      %864 = vmatpush1.bf16.msra.mxu0 0
      %865 = vmatprep.subr.bf16.mxu0 0
      %866 = vmatpush1.bf16.msra.mxu0 0
      %867 = vmatprep.subr.bf16.mxu0 0
      %868 = vmatpush1.bf16.msra.mxu0 0
      %869 = vmatprep.subr.bf16.mxu0 0
      %870 = vmatpush1.bf16.msra.mxu0 0
      %871 = vmatprep.subr.bf16.mxu0 0
      %872 = vmatpush1.bf16.msra.mxu0 0
      %873 = vmatprep.subr.bf16.mxu0 0
      %874 = vmatpush1.bf16.msra.mxu0 0
      %875 = vmatprep.subr.bf16.mxu0 0
      %876 = vmatpush1.bf16.msra.mxu0 0
      %877 = vmatprep.subr.bf16.mxu0 0
      %878 = vmatpush1.bf16.msra.mxu0 0
      %879 = vmatprep.mubr.bf16.mxu0 0
      %880 = vmatmul.mubr.bf16.gmra.mrb[0].mxu0 %v803
      %v881 = vpop.f32.mrb[0].mxu0
      %v882 = vadd.f32 0.0, %v881
      %v883 = vpop.f32.mrb[0].mxu0
      %v884 = vpop.f32.mrb[0].mxu0
      %v885 = vadd.f32 0.0, %v884
      %v886 = vpop.f32.mrb[0].mxu0
      %887 = vmatprep.mubr.bf16.mxu0 0
      %888 = vmatmul.mubr.bf16.gmra.mrb[0].mxu0 %v806
      %v889 = vpop.f32.mrb[0].mxu0
      %v890 = vadd.f32 0.0, %v889
      %v891 = vpop.f32.mrb[0].mxu0
      %v892 = vpop.f32.mrb[0].mxu0
      %v893 = vadd.f32 0.0, %v892
      %v894 = vpop.f32.mrb[0].mxu0
      %895 = vmatprep.mubr.bf16.mxu0 0
      %896 = vmatmul.mubr.bf16.gmra.mrb[0].mxu0 %v809
      %v897 = vpop.f32.mrb[0].mxu0
      %v898 = vadd.f32 0.0, %v897
      %v899 = vpop.f32.mrb[0].mxu0
      %v900 = vpop.f32.mrb[0].mxu0
      %v901 = vadd.f32 0.0, %v900
      %v902 = vpop.f32.mrb[0].mxu0
      %903 = vmatprep.mubr.bf16.mxu0 0
      %904 = vmatmul.mubr.bf16.gmra.mrb[0].mxu0 %v812
      %v905 = vpop.f32.mrb[0].mxu0
      %v906 = vadd.f32 0.0, %v905
      %v907 = vpop.f32.mrb[0].mxu0
      %v908 = vpop.f32.mrb[0].mxu0
      %v909 = vadd.f32 0.0, %v908
      %v910 = vpop.f32.mrb[0].mxu0
      %911 = vmatprep.mubr.bf16.mxu0 0
      %912 = vmatmul.mubr.bf16.gmra.mrb[0].mxu0 %v815
      %v913 = vpop.f32.mrb[0].mxu0
      %v914 = vadd.f32 0.0, %v913
      %v915 = vpop.f32.mrb[0].mxu0
      %v916 = vpop.f32.mrb[0].mxu0
      %v917 = vadd.f32 0.0, %v916
      %v918 = vpop.f32.mrb[0].mxu0
      %919 = vmatprep.mubr.bf16.mxu0 0
      %920 = vmatmul.mubr.bf16.gmra.mrb[0].mxu0 %v818
      %v921 = vpop.f32.mrb[0].mxu0
      %v922 = vadd.f32 0.0, %v921
      %v923 = vpop.f32.mrb[0].mxu0
      %v924 = vpop.f32.mrb[0].mxu0
      %v925 = vadd.f32 0.0, %v924
      %v926 = vpop.f32.mrb[0].mxu0
      %927 = vmatprep.mubr.bf16.mxu0 0
      %928 = vmatmul.mubr.bf16.gmra.mrb[0].mxu0 %v821
      %v929 = vpop.f32.mrb[0].mxu0
      %v930 = vadd.f32 0.0, %v929
      %v931 = vpop.f32.mrb[0].mxu0
      %v932 = vpop.f32.mrb[0].mxu0
      %v933 = vadd.f32 0.0, %v932
      %v934 = vpop.f32.mrb[0].mxu0
      %935 = vmatprep.mubr.bf16.mxu0 0
      %936 = vmatmul.mubr.bf16.gmra.mrb[0].mxu0 %v824
      %v937 = vpop.f32.mrb[0].mxu0
      %v938 = vadd.f32 0.0, %v937
      %v939 = vpop.f32.mrb[0].mxu0
      %v940 = vpop.f32.mrb[0].mxu0
      %v941 = vadd.f32 0.0, %v940
      %v942 = vpop.f32.mrb[0].mxu0
      %943 = vmatprep.mubr.bf16.mxu0 0
      %944 = vmatmul.mubr.bf16.gmra.mrb[0].mxu0 %v827
      %v945 = vpop.f32.mrb[0].mxu0
      %v946 = vadd.f32 0.0, %v945
      %v947 = vpop.f32.mrb[0].mxu0
      %v948 = vpop.f32.mrb[0].mxu0
      %v949 = vadd.f32 0.0, %v948
      %v950 = vpop.f32.mrb[0].mxu0
      %951 = vmatprep.mubr.bf16.mxu0 0
      %952 = vmatmul.mubr.bf16.gmra.mrb[0].mxu0 %v830
      %v953 = vpop.f32.mrb[0].mxu0
      %v954 = vadd.f32 0.0, %v953
      %v955 = vpop.f32.mrb[0].mxu0
      %v956 = vpop.f32.mrb[0].mxu0
      %v957 = vadd.f32 0.0, %v956
      %v958 = vpop.f32.mrb[0].mxu0
      %959 = vmatprep.mubr.bf16.mxu0 0
      %960 = vmatmul.mubr.bf16.gmra.mrb[0].mxu0 %v833
      %v961 = vpop.f32.mrb[0].mxu0
      %v962 = vadd.f32 0.0, %v961
      %v963 = vpop.f32.mrb[0].mxu0
      %v964 = vpop.f32.mrb[0].mxu0
      %v965 = vadd.f32 0.0, %v964
      %v966 = vpop.f32.mrb[0].mxu0
      %967 = vmatprep.mubr.bf16.mxu0 0
      %968 = vmatmul.mubr.bf16.gmra.mrb[0].mxu0 %v836
      %v969 = vpop.f32.mrb[0].mxu0
      %v970 = vadd.f32 0.0, %v969
      %v971 = vpop.f32.mrb[0].mxu0
      %v972 = vpop.f32.mrb[0].mxu0
      %v973 = vadd.f32 0.0, %v972
      %v974 = vpop.f32.mrb[0].mxu0
      %975 = vmatprep.mubr.bf16.mxu0 0
      %976 = vmatmul.mubr.bf16.gmra.mrb[0].mxu0 %v839
      %v977 = vpop.f32.mrb[0].mxu0
      %v978 = vadd.f32 0.0, %v977
      %v979 = vpop.f32.mrb[0].mxu0
      %v980 = vpop.f32.mrb[0].mxu0
      %v981 = vadd.f32 0.0, %v980
      %v982 = vpop.f32.mrb[0].mxu0
      %983 = vmatprep.mubr.bf16.mxu0 0
      %984 = vmatmul.mubr.bf16.gmra.mrb[0].mxu0 %v842
      %v985 = vpop.f32.mrb[0].mxu0
      %v986 = vadd.f32 0.0, %v985
      %v987 = vpop.f32.mrb[0].mxu0
      %v988 = vpop.f32.mrb[0].mxu0
      %v989 = vadd.f32 0.0, %v988
      %v990 = vpop.f32.mrb[0].mxu0
      %991 = vdwg.mxu0
      %v992 = vadd.f32 %v662, %v882
      %v993 = vadd.f32 %v665, %v885
      %v994 = vadd.f32 %v670, %v890
      %v995 = vadd.f32 %v673, %v893
      %v996 = vadd.f32 %v678, %v898
      %v997 = vadd.f32 %v681, %v901
      %v998 = vadd.f32 %v686, %v906
      %v999 = vadd.f32 %v689, %v909
      %v1000 = vadd.f32 %v694, %v914
      %v1001 = vadd.f32 %v697, %v917
      %v1002 = vadd.f32 %v702, %v922
      %v1003 = vadd.f32 %v705, %v925
      %v1004 = vadd.f32 %v710, %v930
      %v1005 = vadd.f32 %v713, %v933
      %v1006 = vadd.f32 %v718, %v938
      %v1007 = vadd.f32 %v721, %v941
      %v1008 = vadd.f32 %v726, %v946
      %v1009 = vadd.f32 %v729, %v949
      %v1010 = vadd.f32 %v734, %v954
      %v1011 = vadd.f32 %v737, %v957
      %v1012 = vadd.f32 %v742, %v962
      %v1013 = vadd.f32 %v745, %v965
      %v1014 = vadd.f32 %v750, %v970
      %v1015 = vadd.f32 %v753, %v973
      %v1016 = vadd.f32 %v758, %v978
      %v1017 = vadd.f32 %v761, %v981
      %v1018 = vadd.f32 %v766, %v986
      %v1019 = vadd.f32 %v769, %v989
      %v1021 = vunpack.c.l.b16 %v201
      %v1022 = vpack.c.b16 %v1021, %v271
      %v1024 = vsel %vm404, %v1022, 0
      %v1027 = vsel %vm447, %v208, 0
      %1029 = vmatprep.subr.bf16.mxu0 0
      %1030 = vmatpush1.bf16.msra.mxu0 %v1027
      %1031 = vmatprep.subr.bf16.mxu0 0
      %1032 = vmatpush1.bf16.msra.mxu0 0
      %1033 = vmatprep.subr.bf16.mxu0 0
      %1034 = vmatpush1.bf16.msra.mxu0 0
      %1035 = vmatprep.subr.bf16.mxu0 0
      %1036 = vmatpush1.bf16.msra.mxu0 0
      %1037 = vmatprep.subr.bf16.mxu0 0
      %1038 = vmatpush1.bf16.msra.mxu0 0
      %1039 = vmatprep.subr.bf16.mxu0 0
      %1040 = vmatpush1.bf16.msra.mxu0 0
      %1041 = vmatprep.subr.bf16.mxu0 0
      %1042 = vmatpush1.bf16.msra.mxu0 0
      %1043 = vmatprep.subr.bf16.mxu0 0
      %1044 = vmatpush1.bf16.msra.mxu0 0
      %1045 = vmatprep.subr.bf16.mxu0 0
      %1046 = vmatpush1.bf16.msra.mxu0 0
      %1047 = vmatprep.subr.bf16.mxu0 0
      %1048 = vmatpush1.bf16.msra.mxu0 0
      %1049 = vmatprep.subr.bf16.mxu0 0
      %1050 = vmatpush1.bf16.msra.mxu0 0
      %1051 = vmatprep.subr.bf16.mxu0 0
      %1052 = vmatpush1.bf16.msra.mxu0 0
      %1053 = vmatprep.subr.bf16.mxu0 0
      %1054 = vmatpush1.bf16.msra.mxu0 0
      %1055 = vmatprep.subr.bf16.mxu0 0
      %1056 = vmatpush1.bf16.msra.mxu0 0
      %1057 = vmatprep.subr.bf16.mxu0 0
      %1058 = vmatpush1.bf16.msra.mxu0 0
      %1059 = vmatprep.subr.bf16.mxu0 0
      %1060 = vmatpush1.bf16.msra.mxu0 0
      %1061 = vmatprep.mubr.bf16.mxu0 0
      %1062 = vmatmul.mubr.bf16.gmra.mrb[0].mxu0 %v598
      %v1063 = vpop.f32.mrb[0].mxu0
      %v1064 = vadd.f32 0.0, %v1063
      %v1065 = vpop.f32.mrb[0].mxu0
      %v1066 = vpop.f32.mrb[0].mxu0
      %v1067 = vadd.f32 0.0, %v1066
      %v1068 = vpop.f32.mrb[0].mxu0
      %1069 = vmatprep.mubr.bf16.mxu0 0
      %1070 = vmatmul.mubr.bf16.gmra.mrb[0].mxu0 %v600
      %v1071 = vpop.f32.mrb[0].mxu0
      %v1072 = vadd.f32 0.0, %v1071
      %v1073 = vpop.f32.mrb[0].mxu0
      %v1074 = vpop.f32.mrb[0].mxu0
      %v1075 = vadd.f32 0.0, %v1074
      %v1076 = vpop.f32.mrb[0].mxu0
      %1077 = vmatprep.mubr.bf16.mxu0 0
      %1078 = vmatmul.mubr.bf16.gmra.mrb[0].mxu0 %v602
      %v1079 = vpop.f32.mrb[0].mxu0
      %v1080 = vadd.f32 0.0, %v1079
      %v1081 = vpop.f32.mrb[0].mxu0
      %v1082 = vpop.f32.mrb[0].mxu0
      %v1083 = vadd.f32 0.0, %v1082
      %v1084 = vpop.f32.mrb[0].mxu0
      %1085 = vmatprep.mubr.bf16.mxu0 0
      %1086 = vmatmul.mubr.bf16.gmra.mrb[0].mxu0 %v604
      %v1087 = vpop.f32.mrb[0].mxu0
      %v1088 = vadd.f32 0.0, %v1087
      %v1089 = vpop.f32.mrb[0].mxu0
      %v1090 = vpop.f32.mrb[0].mxu0
      %v1091 = vadd.f32 0.0, %v1090
      %v1092 = vpop.f32.mrb[0].mxu0
      %1093 = vmatprep.mubr.bf16.mxu0 0
      %1094 = vmatmul.mubr.bf16.gmra.mrb[0].mxu0 %v606
      %v1095 = vpop.f32.mrb[0].mxu0
      %v1096 = vadd.f32 0.0, %v1095
      %v1097 = vpop.f32.mrb[0].mxu0
      %v1098 = vpop.f32.mrb[0].mxu0
      %v1099 = vadd.f32 0.0, %v1098
      %v1100 = vpop.f32.mrb[0].mxu0
      %1101 = vmatprep.mubr.bf16.mxu0 0
      %1102 = vmatmul.mubr.bf16.gmra.mrb[0].mxu0 %v608
      %v1103 = vpop.f32.mrb[0].mxu0
      %v1104 = vadd.f32 0.0, %v1103
      %v1105 = vpop.f32.mrb[0].mxu0
      %v1106 = vpop.f32.mrb[0].mxu0
      %v1107 = vadd.f32 0.0, %v1106
      %v1108 = vpop.f32.mrb[0].mxu0
      %1109 = vmatprep.mubr.bf16.mxu0 0
      %1110 = vmatmul.mubr.bf16.gmra.mrb[0].mxu0 %v610
      %v1111 = vpop.f32.mrb[0].mxu0
      %v1112 = vadd.f32 0.0, %v1111
      %v1113 = vpop.f32.mrb[0].mxu0
      %v1114 = vpop.f32.mrb[0].mxu0
      %v1115 = vadd.f32 0.0, %v1114
      %v1116 = vpop.f32.mrb[0].mxu0
      %1117 = vmatprep.mubr.bf16.mxu0 0
      %1118 = vmatmul.mubr.bf16.gmra.mrb[0].mxu0 %v612
      %v1119 = vpop.f32.mrb[0].mxu0
      %v1120 = vadd.f32 0.0, %v1119
      %v1121 = vpop.f32.mrb[0].mxu0
      %v1122 = vpop.f32.mrb[0].mxu0
      %v1123 = vadd.f32 0.0, %v1122
      %v1124 = vpop.f32.mrb[0].mxu0
      %1125 = vmatprep.mubr.bf16.mxu0 0
      %1126 = vmatmul.mubr.bf16.gmra.mrb[0].mxu0 %v614
      %v1127 = vpop.f32.mrb[0].mxu0
      %v1128 = vadd.f32 0.0, %v1127
      %v1129 = vpop.f32.mrb[0].mxu0
      %v1130 = vpop.f32.mrb[0].mxu0
      %v1131 = vadd.f32 0.0, %v1130
      %v1132 = vpop.f32.mrb[0].mxu0
      %1133 = vmatprep.mubr.bf16.mxu0 0
      %1134 = vmatmul.mubr.bf16.gmra.mrb[0].mxu0 %v616
      %v1135 = vpop.f32.mrb[0].mxu0
      %v1136 = vadd.f32 0.0, %v1135
      %v1137 = vpop.f32.mrb[0].mxu0
      %v1138 = vpop.f32.mrb[0].mxu0
      %v1139 = vadd.f32 0.0, %v1138
      %v1140 = vpop.f32.mrb[0].mxu0
      %1141 = vmatprep.mubr.bf16.mxu0 0
      %1142 = vmatmul.mubr.bf16.gmra.mrb[0].mxu0 %v618
      %v1143 = vpop.f32.mrb[0].mxu0
      %v1144 = vadd.f32 0.0, %v1143
      %v1145 = vpop.f32.mrb[0].mxu0
      %v1146 = vpop.f32.mrb[0].mxu0
      %v1147 = vadd.f32 0.0, %v1146
      %v1148 = vpop.f32.mrb[0].mxu0
      %1149 = vmatprep.mubr.bf16.mxu0 0
      %1150 = vmatmul.mubr.bf16.gmra.mrb[0].mxu0 %v620
      %v1151 = vpop.f32.mrb[0].mxu0
      %v1152 = vadd.f32 0.0, %v1151
      %v1153 = vpop.f32.mrb[0].mxu0
      %v1154 = vpop.f32.mrb[0].mxu0
      %v1155 = vadd.f32 0.0, %v1154
      %v1156 = vpop.f32.mrb[0].mxu0
      %1157 = vmatprep.mubr.bf16.mxu0 0
      %1158 = vmatmul.mubr.bf16.gmra.mrb[0].mxu0 %v622
      %v1159 = vpop.f32.mrb[0].mxu0
      %v1160 = vadd.f32 0.0, %v1159
      %v1161 = vpop.f32.mrb[0].mxu0
      %v1162 = vpop.f32.mrb[0].mxu0
      %v1163 = vadd.f32 0.0, %v1162
      %v1164 = vpop.f32.mrb[0].mxu0
      %1165 = vmatprep.mubr.bf16.mxu0 0
      %1166 = vmatmul.mubr.bf16.gmra.mrb[0].mxu0 %v1024
      %v1167 = vpop.f32.mrb[0].mxu0
      %v1168 = vadd.f32 0.0, %v1167
      %v1169 = vpop.f32.mrb[0].mxu0
      %v1170 = vpop.f32.mrb[0].mxu0
      %v1171 = vadd.f32 0.0, %v1170
      %v1172 = vpop.f32.mrb[0].mxu0
      %1173 = vdwg.mxu0
      %v1174 = vadd.f32 %v992, %v1064
      %v1175 = vadd.f32 %v993, %v1067
      %v1176 = vadd.f32 %v994, %v1072
      %v1177 = vadd.f32 %v995, %v1075
      %v1178 = vadd.f32 %v996, %v1080
      %v1179 = vadd.f32 %v997, %v1083
      %v1180 = vadd.f32 %v998, %v1088
      %v1181 = vadd.f32 %v999, %v1091
      %v1182 = vadd.f32 %v1000, %v1096
      %v1183 = vadd.f32 %v1001, %v1099
      %v1184 = vadd.f32 %v1002, %v1104
      %v1185 = vadd.f32 %v1003, %v1107
      %v1186 = vadd.f32 %v1004, %v1112
      %v1187 = vadd.f32 %v1005, %v1115
      %v1188 = vadd.f32 %v1006, %v1120
      %v1189 = vadd.f32 %v1007, %v1123
      %v1190 = vadd.f32 %v1008, %v1128
      %v1191 = vadd.f32 %v1009, %v1131
      %v1192 = vadd.f32 %v1010, %v1136
      %v1193 = vadd.f32 %v1011, %v1139
      %v1194 = vadd.f32 %v1012, %v1144
      %v1195 = vadd.f32 %v1013, %v1147
      %v1196 = vadd.f32 %v1014, %v1152
      %v1197 = vadd.f32 %v1015, %v1155
      %v1198 = vadd.f32 %v1016, %v1160
      %v1199 = vadd.f32 %v1017, %v1163
      %v1200 = vadd.f32 %v1018, %v1168
      %v1201 = vadd.f32 %v1019, %v1171
      %v1203 = vunpack.c.l.b16 %v202
      %v1204 = vpack.c.b16 %v1203, %v1203
      %v1205 = vshll.u32 %v1022, 16
      %v1207 = vrot.slane %v1205, 1
      %v1208 = vsel %vm287, %v398, %v1207
      %v1209 = vshrl.u32 %v1022, 16
      %v1211 = vor.u32 %v1209, %v1207
      %v1213 = vshll.u32 %v1204, 16
      %v1215 = vrot.slane %v1213, 1
      %v1216 = vsel %vm287, %v1211, %v1215
      %v1218 = vsel %vm404, %v1208, 0
      %v1221 = vsel %vm404, %v1216, 0
      %v1224 = vsel %vm447, %v209, 0
      %1226 = vmatprep.subr.bf16.mxu0 0
      %1227 = vmatpush1.bf16.msra.mxu0 %v1224
      %1228 = vmatprep.subr.bf16.mxu0 0
      %1229 = vmatpush1.bf16.msra.mxu0 0
      %1230 = vmatprep.subr.bf16.mxu0 0
      %1231 = vmatpush1.bf16.msra.mxu0 0
      %1232 = vmatprep.subr.bf16.mxu0 0
      %1233 = vmatpush1.bf16.msra.mxu0 0
      %1234 = vmatprep.subr.bf16.mxu0 0
      %1235 = vmatpush1.bf16.msra.mxu0 0
      %1236 = vmatprep.subr.bf16.mxu0 0
      %1237 = vmatpush1.bf16.msra.mxu0 0
      %1238 = vmatprep.subr.bf16.mxu0 0
      %1239 = vmatpush1.bf16.msra.mxu0 0
      %1240 = vmatprep.subr.bf16.mxu0 0
      %1241 = vmatpush1.bf16.msra.mxu0 0
      %1242 = vmatprep.subr.bf16.mxu0 0
      %1243 = vmatpush1.bf16.msra.mxu0 0
      %1244 = vmatprep.subr.bf16.mxu0 0
      %1245 = vmatpush1.bf16.msra.mxu0 0
      %1246 = vmatprep.subr.bf16.mxu0 0
      %1247 = vmatpush1.bf16.msra.mxu0 0
      %1248 = vmatprep.subr.bf16.mxu0 0
      %1249 = vmatpush1.bf16.msra.mxu0 0
      %1250 = vmatprep.subr.bf16.mxu0 0
      %1251 = vmatpush1.bf16.msra.mxu0 0
      %1252 = vmatprep.subr.bf16.mxu0 0
      %1253 = vmatpush1.bf16.msra.mxu0 0
      %1254 = vmatprep.subr.bf16.mxu0 0
      %1255 = vmatpush1.bf16.msra.mxu0 0
      %1256 = vmatprep.subr.bf16.mxu0 0
      %1257 = vmatpush1.bf16.msra.mxu0 0
      %1258 = vmatprep.mubr.bf16.mxu0 0
      %1259 = vmatmul.mubr.bf16.gmra.mrb[0].mxu0 %v409
      %v1260 = vpop.f32.mrb[0].mxu0
      %v1261 = vadd.f32 0.0, %v1260
      %v1262 = vpop.f32.mrb[0].mxu0
      %v1263 = vpop.f32.mrb[0].mxu0
      %v1264 = vadd.f32 0.0, %v1263
      %v1265 = vpop.f32.mrb[0].mxu0
      %1266 = vmatprep.mubr.bf16.mxu0 0
      %1267 = vmatmul.mubr.bf16.gmra.mrb[0].mxu0 %v412
      %v1268 = vpop.f32.mrb[0].mxu0
      %v1269 = vadd.f32 0.0, %v1268
      %v1270 = vpop.f32.mrb[0].mxu0
      %v1271 = vpop.f32.mrb[0].mxu0
      %v1272 = vadd.f32 0.0, %v1271
      %v1273 = vpop.f32.mrb[0].mxu0
      %1274 = vmatprep.mubr.bf16.mxu0 0
      %1275 = vmatmul.mubr.bf16.gmra.mrb[0].mxu0 %v415
      %v1276 = vpop.f32.mrb[0].mxu0
      %v1277 = vadd.f32 0.0, %v1276
      %v1278 = vpop.f32.mrb[0].mxu0
      %v1279 = vpop.f32.mrb[0].mxu0
      %v1280 = vadd.f32 0.0, %v1279
      %v1281 = vpop.f32.mrb[0].mxu0
      %1282 = vmatprep.mubr.bf16.mxu0 0
      %1283 = vmatmul.mubr.bf16.gmra.mrb[0].mxu0 %v418
      %v1284 = vpop.f32.mrb[0].mxu0
      %v1285 = vadd.f32 0.0, %v1284
      %v1286 = vpop.f32.mrb[0].mxu0
      %v1287 = vpop.f32.mrb[0].mxu0
      %v1288 = vadd.f32 0.0, %v1287
      %v1289 = vpop.f32.mrb[0].mxu0
      %1290 = vmatprep.mubr.bf16.mxu0 0
      %1291 = vmatmul.mubr.bf16.gmra.mrb[0].mxu0 %v421
      %v1292 = vpop.f32.mrb[0].mxu0
      %v1293 = vadd.f32 0.0, %v1292
      %v1294 = vpop.f32.mrb[0].mxu0
      %v1295 = vpop.f32.mrb[0].mxu0
      %v1296 = vadd.f32 0.0, %v1295
      %v1297 = vpop.f32.mrb[0].mxu0
      %1298 = vmatprep.mubr.bf16.mxu0 0
      %1299 = vmatmul.mubr.bf16.gmra.mrb[0].mxu0 %v424
      %v1300 = vpop.f32.mrb[0].mxu0
      %v1301 = vadd.f32 0.0, %v1300
      %v1302 = vpop.f32.mrb[0].mxu0
      %v1303 = vpop.f32.mrb[0].mxu0
      %v1304 = vadd.f32 0.0, %v1303
      %v1305 = vpop.f32.mrb[0].mxu0
      %1306 = vmatprep.mubr.bf16.mxu0 0
      %1307 = vmatmul.mubr.bf16.gmra.mrb[0].mxu0 %v427
      %v1308 = vpop.f32.mrb[0].mxu0
      %v1309 = vadd.f32 0.0, %v1308
      %v1310 = vpop.f32.mrb[0].mxu0
      %v1311 = vpop.f32.mrb[0].mxu0
      %v1312 = vadd.f32 0.0, %v1311
      %v1313 = vpop.f32.mrb[0].mxu0
      %1314 = vmatprep.mubr.bf16.mxu0 0
      %1315 = vmatmul.mubr.bf16.gmra.mrb[0].mxu0 %v430
      %v1316 = vpop.f32.mrb[0].mxu0
      %v1317 = vadd.f32 0.0, %v1316
      %v1318 = vpop.f32.mrb[0].mxu0
      %v1319 = vpop.f32.mrb[0].mxu0
      %v1320 = vadd.f32 0.0, %v1319
      %v1321 = vpop.f32.mrb[0].mxu0
      %1322 = vmatprep.mubr.bf16.mxu0 0
      %1323 = vmatmul.mubr.bf16.gmra.mrb[0].mxu0 %v433
      %v1324 = vpop.f32.mrb[0].mxu0
      %v1325 = vadd.f32 0.0, %v1324
      %v1326 = vpop.f32.mrb[0].mxu0
      %v1327 = vpop.f32.mrb[0].mxu0
      %v1328 = vadd.f32 0.0, %v1327
      %v1329 = vpop.f32.mrb[0].mxu0
      %1330 = vmatprep.mubr.bf16.mxu0 0
      %1331 = vmatmul.mubr.bf16.gmra.mrb[0].mxu0 %v436
      %v1332 = vpop.f32.mrb[0].mxu0
      %v1333 = vadd.f32 0.0, %v1332
      %v1334 = vpop.f32.mrb[0].mxu0
      %v1335 = vpop.f32.mrb[0].mxu0
      %v1336 = vadd.f32 0.0, %v1335
      %v1337 = vpop.f32.mrb[0].mxu0
      %1338 = vmatprep.mubr.bf16.mxu0 0
      %1339 = vmatmul.mubr.bf16.gmra.mrb[0].mxu0 %v439
      %v1340 = vpop.f32.mrb[0].mxu0
      %v1341 = vadd.f32 0.0, %v1340
      %v1342 = vpop.f32.mrb[0].mxu0
      %v1343 = vpop.f32.mrb[0].mxu0
      %v1344 = vadd.f32 0.0, %v1343
      %v1345 = vpop.f32.mrb[0].mxu0
      %1346 = vmatprep.mubr.bf16.mxu0 0
      %1347 = vmatmul.mubr.bf16.gmra.mrb[0].mxu0 %v442
      %v1348 = vpop.f32.mrb[0].mxu0
      %v1349 = vadd.f32 0.0, %v1348
      %v1350 = vpop.f32.mrb[0].mxu0
      %v1351 = vpop.f32.mrb[0].mxu0
      %v1352 = vadd.f32 0.0, %v1351
      %v1353 = vpop.f32.mrb[0].mxu0
      %1354 = vmatprep.mubr.bf16.mxu0 0
      %1355 = vmatmul.mubr.bf16.gmra.mrb[0].mxu0 %v1218
      %v1356 = vpop.f32.mrb[0].mxu0
      %v1357 = vadd.f32 0.0, %v1356
      %v1358 = vpop.f32.mrb[0].mxu0
      %v1359 = vpop.f32.mrb[0].mxu0
      %v1360 = vadd.f32 0.0, %v1359
      %v1361 = vpop.f32.mrb[0].mxu0
      %1362 = vmatprep.mubr.bf16.mxu0 0
      %1363 = vmatmul.mubr.bf16.gmra.mrb[0].mxu0 %v1221
      %v1364 = vpop.f32.mrb[0].mxu0
      %v1365 = vadd.f32 0.0, %v1364
      %v1366 = vpop.f32.mrb[0].mxu0
      %v1367 = vpop.f32.mrb[0].mxu0
      %v1368 = vadd.f32 0.0, %v1367
      %v1369 = vpop.f32.mrb[0].mxu0
      %1370 = vdwg.mxu0
      %v1371 = vadd.f32 %v1174, %v1261
      %v1372 = vadd.f32 %v1175, %v1264
      %v1373 = vadd.f32 %v1176, %v1269
      %v1374 = vadd.f32 %v1177, %v1272
      %v1375 = vadd.f32 %v1178, %v1277
      %v1376 = vadd.f32 %v1179, %v1280
      %v1377 = vadd.f32 %v1180, %v1285
      %v1378 = vadd.f32 %v1181, %v1288
      %v1379 = vadd.f32 %v1182, %v1293
      %v1380 = vadd.f32 %v1183, %v1296
      %v1381 = vadd.f32 %v1184, %v1301
      %v1382 = vadd.f32 %v1185, %v1304
      %v1383 = vadd.f32 %v1186, %v1309
      %v1384 = vadd.f32 %v1187, %v1312
      %v1385 = vadd.f32 %v1188, %v1317
      %v1386 = vadd.f32 %v1189, %v1320
      %v1387 = vadd.f32 %v1190, %v1325
      %v1388 = vadd.f32 %v1191, %v1328
      %v1389 = vadd.f32 %v1192, %v1333
      %v1390 = vadd.f32 %v1193, %v1336
      %v1391 = vadd.f32 %v1194, %v1341
      %v1392 = vadd.f32 %v1195, %v1344
      %v1393 = vadd.f32 %v1196, %v1349
      %v1394 = vadd.f32 %v1197, %v1352
      %v1395 = vadd.f32 %v1198, %v1357
      %v1396 = vadd.f32 %v1199, %v1360
      %v1397 = vadd.f32 %v1200, %v1365
      %v1398 = vadd.f32 %v1201, %v1368
      %v1399 = vrot.slane %v1022, 1
      %v1400 = vsel %vm772, %v798, %v1399
      %v1401 = vrot.slane %v1204, 1
      %v1402 = vsel %vm772, %v1399, %v1401
      %v1404 = vsel %vm404, %v1400, 0
      %v1407 = vsel %vm404, %v1402, 0
      %v1410 = vsel %vm447, %v210, 0
      %1412 = vmatprep.subr.bf16.mxu0 0
      %1413 = vmatpush1.bf16.msra.mxu0 %v1410
      %1414 = vmatprep.subr.bf16.mxu0 0
      %1415 = vmatpush1.bf16.msra.mxu0 0
      %1416 = vmatprep.subr.bf16.mxu0 0
      %1417 = vmatpush1.bf16.msra.mxu0 0
      %1418 = vmatprep.subr.bf16.mxu0 0
      %1419 = vmatpush1.bf16.msra.mxu0 0
      %1420 = vmatprep.subr.bf16.mxu0 0
      %1421 = vmatpush1.bf16.msra.mxu0 0
      %1422 = vmatprep.subr.bf16.mxu0 0
      %1423 = vmatpush1.bf16.msra.mxu0 0
      %1424 = vmatprep.subr.bf16.mxu0 0
      %1425 = vmatpush1.bf16.msra.mxu0 0
      %1426 = vmatprep.subr.bf16.mxu0 0
      %1427 = vmatpush1.bf16.msra.mxu0 0
      %1428 = vmatprep.subr.bf16.mxu0 0
      %1429 = vmatpush1.bf16.msra.mxu0 0
      %1430 = vmatprep.subr.bf16.mxu0 0
      %1431 = vmatpush1.bf16.msra.mxu0 0
      %1432 = vmatprep.subr.bf16.mxu0 0
      %1433 = vmatpush1.bf16.msra.mxu0 0
      %1434 = vmatprep.subr.bf16.mxu0 0
      %1435 = vmatpush1.bf16.msra.mxu0 0
      %1436 = vmatprep.subr.bf16.mxu0 0
      %1437 = vmatpush1.bf16.msra.mxu0 0
      %1438 = vmatprep.subr.bf16.mxu0 0
      %1439 = vmatpush1.bf16.msra.mxu0 0
      %1440 = vmatprep.subr.bf16.mxu0 0
      %1441 = vmatpush1.bf16.msra.mxu0 0
      %1442 = vmatprep.subr.bf16.mxu0 0
      %1443 = vmatpush1.bf16.msra.mxu0 0
      %1444 = vmatprep.mubr.bf16.mxu0 0
      %1445 = vmatmul.mubr.bf16.gmra.mrb[0].mxu0 %v806
      %v1446 = vpop.f32.mrb[0].mxu0
      %v1447 = vadd.f32 0.0, %v1446
      %v1448 = vpop.f32.mrb[0].mxu0
      %v1449 = vpop.f32.mrb[0].mxu0
      %v1450 = vadd.f32 0.0, %v1449
      %v1451 = vpop.f32.mrb[0].mxu0
      %1452 = vmatprep.mubr.bf16.mxu0 0
      %1453 = vmatmul.mubr.bf16.gmra.mrb[0].mxu0 %v809
      %v1454 = vpop.f32.mrb[0].mxu0
      %v1455 = vadd.f32 0.0, %v1454
      %v1456 = vpop.f32.mrb[0].mxu0
      %v1457 = vpop.f32.mrb[0].mxu0
      %v1458 = vadd.f32 0.0, %v1457
      %v1459 = vpop.f32.mrb[0].mxu0
      %1460 = vmatprep.mubr.bf16.mxu0 0
      %1461 = vmatmul.mubr.bf16.gmra.mrb[0].mxu0 %v812
      %v1462 = vpop.f32.mrb[0].mxu0
      %v1463 = vadd.f32 0.0, %v1462
      %v1464 = vpop.f32.mrb[0].mxu0
      %v1465 = vpop.f32.mrb[0].mxu0
      %v1466 = vadd.f32 0.0, %v1465
      %v1467 = vpop.f32.mrb[0].mxu0
      %1468 = vmatprep.mubr.bf16.mxu0 0
      %1469 = vmatmul.mubr.bf16.gmra.mrb[0].mxu0 %v815
      %v1470 = vpop.f32.mrb[0].mxu0
      %v1471 = vadd.f32 0.0, %v1470
      %v1472 = vpop.f32.mrb[0].mxu0
      %v1473 = vpop.f32.mrb[0].mxu0
      %v1474 = vadd.f32 0.0, %v1473
      %v1475 = vpop.f32.mrb[0].mxu0
      %1476 = vmatprep.mubr.bf16.mxu0 0
      %1477 = vmatmul.mubr.bf16.gmra.mrb[0].mxu0 %v818
      %v1478 = vpop.f32.mrb[0].mxu0
      %v1479 = vadd.f32 0.0, %v1478
      %v1480 = vpop.f32.mrb[0].mxu0
      %v1481 = vpop.f32.mrb[0].mxu0
      %v1482 = vadd.f32 0.0, %v1481
      %v1483 = vpop.f32.mrb[0].mxu0
      %1484 = vmatprep.mubr.bf16.mxu0 0
      %1485 = vmatmul.mubr.bf16.gmra.mrb[0].mxu0 %v821
      %v1486 = vpop.f32.mrb[0].mxu0
      %v1487 = vadd.f32 0.0, %v1486
      %v1488 = vpop.f32.mrb[0].mxu0
      %v1489 = vpop.f32.mrb[0].mxu0
      %v1490 = vadd.f32 0.0, %v1489
      %v1491 = vpop.f32.mrb[0].mxu0
      %1492 = vmatprep.mubr.bf16.mxu0 0
      %1493 = vmatmul.mubr.bf16.gmra.mrb[0].mxu0 %v824
      %v1494 = vpop.f32.mrb[0].mxu0
      %v1495 = vadd.f32 0.0, %v1494
      %v1496 = vpop.f32.mrb[0].mxu0
      %v1497 = vpop.f32.mrb[0].mxu0
      %v1498 = vadd.f32 0.0, %v1497
      %v1499 = vpop.f32.mrb[0].mxu0
      %1500 = vmatprep.mubr.bf16.mxu0 0
      %1501 = vmatmul.mubr.bf16.gmra.mrb[0].mxu0 %v827
      %v1502 = vpop.f32.mrb[0].mxu0
      %v1503 = vadd.f32 0.0, %v1502
      %v1504 = vpop.f32.mrb[0].mxu0
      %v1505 = vpop.f32.mrb[0].mxu0
      %v1506 = vadd.f32 0.0, %v1505
      %v1507 = vpop.f32.mrb[0].mxu0
      %1508 = vmatprep.mubr.bf16.mxu0 0
      %1509 = vmatmul.mubr.bf16.gmra.mrb[0].mxu0 %v830
      %v1510 = vpop.f32.mrb[0].mxu0
      %v1511 = vadd.f32 0.0, %v1510
      %v1512 = vpop.f32.mrb[0].mxu0
      %v1513 = vpop.f32.mrb[0].mxu0
      %v1514 = vadd.f32 0.0, %v1513
      %v1515 = vpop.f32.mrb[0].mxu0
      %1516 = vmatprep.mubr.bf16.mxu0 0
      %1517 = vmatmul.mubr.bf16.gmra.mrb[0].mxu0 %v833
      %v1518 = vpop.f32.mrb[0].mxu0
      %v1519 = vadd.f32 0.0, %v1518
      %v1520 = vpop.f32.mrb[0].mxu0
      %v1521 = vpop.f32.mrb[0].mxu0
      %v1522 = vadd.f32 0.0, %v1521
      %v1523 = vpop.f32.mrb[0].mxu0
      %1524 = vmatprep.mubr.bf16.mxu0 0
      %1525 = vmatmul.mubr.bf16.gmra.mrb[0].mxu0 %v836
      %v1526 = vpop.f32.mrb[0].mxu0
      %v1527 = vadd.f32 0.0, %v1526
      %v1528 = vpop.f32.mrb[0].mxu0
      %v1529 = vpop.f32.mrb[0].mxu0
      %v1530 = vadd.f32 0.0, %v1529
      %v1531 = vpop.f32.mrb[0].mxu0
      %1532 = vmatprep.mubr.bf16.mxu0 0
      %1533 = vmatmul.mubr.bf16.gmra.mrb[0].mxu0 %v839
      %v1534 = vpop.f32.mrb[0].mxu0
      %v1535 = vadd.f32 0.0, %v1534
      %v1536 = vpop.f32.mrb[0].mxu0
      %v1537 = vpop.f32.mrb[0].mxu0
      %v1538 = vadd.f32 0.0, %v1537
      %v1539 = vpop.f32.mrb[0].mxu0
      %1540 = vmatprep.mubr.bf16.mxu0 0
      %1541 = vmatmul.mubr.bf16.gmra.mrb[0].mxu0 %v1404
      %v1542 = vpop.f32.mrb[0].mxu0
      %v1543 = vadd.f32 0.0, %v1542
      %v1544 = vpop.f32.mrb[0].mxu0
      %v1545 = vpop.f32.mrb[0].mxu0
      %v1546 = vadd.f32 0.0, %v1545
      %v1547 = vpop.f32.mrb[0].mxu0
      %1548 = vmatprep.mubr.bf16.mxu0 0
      %1549 = vmatmul.mubr.bf16.gmra.mrb[0].mxu0 %v1407
      %v1550 = vpop.f32.mrb[0].mxu0
      %v1551 = vadd.f32 0.0, %v1550
      %v1552 = vpop.f32.mrb[0].mxu0
      %v1553 = vpop.f32.mrb[0].mxu0
      %v1554 = vadd.f32 0.0, %v1553
      %v1555 = vpop.f32.mrb[0].mxu0
      %1556 = vdwg.mxu0
      %v1557 = vadd.f32 %v1371, %v1447
      %v1558 = vadd.f32 %v1372, %v1450
      %v1559 = vadd.f32 %v1373, %v1455
      %v1560 = vadd.f32 %v1374, %v1458
      %v1561 = vadd.f32 %v1375, %v1463
      %v1562 = vadd.f32 %v1376, %v1466
      %v1563 = vadd.f32 %v1377, %v1471
      %v1564 = vadd.f32 %v1378, %v1474
      %v1565 = vadd.f32 %v1379, %v1479
      %v1566 = vadd.f32 %v1380, %v1482
      %v1567 = vadd.f32 %v1381, %v1487
      %v1568 = vadd.f32 %v1382, %v1490
      %v1569 = vadd.f32 %v1383, %v1495
      %v1570 = vadd.f32 %v1384, %v1498
      %v1571 = vadd.f32 %v1385, %v1503
      %v1572 = vadd.f32 %v1386, %v1506
      %v1573 = vadd.f32 %v1387, %v1511
      %v1574 = vadd.f32 %v1388, %v1514
      %v1575 = vadd.f32 %v1389, %v1519
      %v1576 = vadd.f32 %v1390, %v1522
      %v1577 = vadd.f32 %v1391, %v1527
      %v1578 = vadd.f32 %v1392, %v1530
      %v1579 = vadd.f32 %v1393, %v1535
      %v1580 = vadd.f32 %v1394, %v1538
      %v1581 = vadd.f32 %v1395, %v1543
      %v1582 = vadd.f32 %v1396, %v1546
      %v1583 = vadd.f32 %v1397, %v1551
      %v1584 = vadd.f32 %v1398, %v1554
      %v1586 = vunpack.c.l.b16 %v203
      %v1587 = vpack.c.b16 %v1586, %v1203
      %v1589 = vsel %vm404, %v1587, 0
      %v1592 = vsel %vm447, %v211, 0
      %1594 = vmatprep.subr.bf16.mxu0 0
      %1595 = vmatpush1.bf16.msra.mxu0 %v1592
      %1596 = vmatprep.subr.bf16.mxu0 0
      %1597 = vmatpush1.bf16.msra.mxu0 0
      %1598 = vmatprep.subr.bf16.mxu0 0
      %1599 = vmatpush1.bf16.msra.mxu0 0
      %1600 = vmatprep.subr.bf16.mxu0 0
      %1601 = vmatpush1.bf16.msra.mxu0 0
      %1602 = vmatprep.subr.bf16.mxu0 0
      %1603 = vmatpush1.bf16.msra.mxu0 0
      %1604 = vmatprep.subr.bf16.mxu0 0
      %1605 = vmatpush1.bf16.msra.mxu0 0
      %1606 = vmatprep.subr.bf16.mxu0 0
      %1607 = vmatpush1.bf16.msra.mxu0 0
      %1608 = vmatprep.subr.bf16.mxu0 0
      %1609 = vmatpush1.bf16.msra.mxu0 0
      %1610 = vmatprep.subr.bf16.mxu0 0
      %1611 = vmatpush1.bf16.msra.mxu0 0
      %1612 = vmatprep.subr.bf16.mxu0 0
      %1613 = vmatpush1.bf16.msra.mxu0 0
      %1614 = vmatprep.subr.bf16.mxu0 0
      %1615 = vmatpush1.bf16.msra.mxu0 0
      %1616 = vmatprep.subr.bf16.mxu0 0
      %1617 = vmatpush1.bf16.msra.mxu0 0
      %1618 = vmatprep.subr.bf16.mxu0 0
      %1619 = vmatpush1.bf16.msra.mxu0 0
      %1620 = vmatprep.subr.bf16.mxu0 0
      %1621 = vmatpush1.bf16.msra.mxu0 0
      %1622 = vmatprep.subr.bf16.mxu0 0
      %1623 = vmatpush1.bf16.msra.mxu0 0
      %1624 = vmatprep.subr.bf16.mxu0 0
      %1625 = vmatpush1.bf16.msra.mxu0 0
      %1626 = vmatprep.mubr.bf16.mxu0 0
      %1627 = vmatmul.mubr.bf16.gmra.mrb[0].mxu0 %v600
      %v1628 = vpop.f32.mrb[0].mxu0
      %v1629 = vadd.f32 0.0, %v1628
      %v1630 = vpop.f32.mrb[0].mxu0
      %v1631 = vpop.f32.mrb[0].mxu0
      %v1632 = vadd.f32 0.0, %v1631
      %v1633 = vpop.f32.mrb[0].mxu0
      %1634 = vmatprep.mubr.bf16.mxu0 0
      %1635 = vmatmul.mubr.bf16.gmra.mrb[0].mxu0 %v602
      %v1636 = vpop.f32.mrb[0].mxu0
      %v1637 = vadd.f32 0.0, %v1636
      %v1638 = vpop.f32.mrb[0].mxu0
      %v1639 = vpop.f32.mrb[0].mxu0
      %v1640 = vadd.f32 0.0, %v1639
      %v1641 = vpop.f32.mrb[0].mxu0
      %1642 = vmatprep.mubr.bf16.mxu0 0
      %1643 = vmatmul.mubr.bf16.gmra.mrb[0].mxu0 %v604
      %v1644 = vpop.f32.mrb[0].mxu0
      %v1645 = vadd.f32 0.0, %v1644
      %v1646 = vpop.f32.mrb[0].mxu0
      %v1647 = vpop.f32.mrb[0].mxu0
      %v1648 = vadd.f32 0.0, %v1647
      %v1649 = vpop.f32.mrb[0].mxu0
      %1650 = vmatprep.mubr.bf16.mxu0 0
      %1651 = vmatmul.mubr.bf16.gmra.mrb[0].mxu0 %v606
      %v1652 = vpop.f32.mrb[0].mxu0
      %v1653 = vadd.f32 0.0, %v1652
      %v1654 = vpop.f32.mrb[0].mxu0
      %v1655 = vpop.f32.mrb[0].mxu0
      %v1656 = vadd.f32 0.0, %v1655
      %v1657 = vpop.f32.mrb[0].mxu0
      %1658 = vmatprep.mubr.bf16.mxu0 0
      %1659 = vmatmul.mubr.bf16.gmra.mrb[0].mxu0 %v608
      %v1660 = vpop.f32.mrb[0].mxu0
      %v1661 = vadd.f32 0.0, %v1660
      %v1662 = vpop.f32.mrb[0].mxu0
      %v1663 = vpop.f32.mrb[0].mxu0
      %v1664 = vadd.f32 0.0, %v1663
      %v1665 = vpop.f32.mrb[0].mxu0
      %1666 = vmatprep.mubr.bf16.mxu0 0
      %1667 = vmatmul.mubr.bf16.gmra.mrb[0].mxu0 %v610
      %v1668 = vpop.f32.mrb[0].mxu0
      %v1669 = vadd.f32 0.0, %v1668
      %v1670 = vpop.f32.mrb[0].mxu0
      %v1671 = vpop.f32.mrb[0].mxu0
      %v1672 = vadd.f32 0.0, %v1671
      %v1673 = vpop.f32.mrb[0].mxu0
      %1674 = vmatprep.mubr.bf16.mxu0 0
      %1675 = vmatmul.mubr.bf16.gmra.mrb[0].mxu0 %v612
      %v1676 = vpop.f32.mrb[0].mxu0
      %v1677 = vadd.f32 0.0, %v1676
      %v1678 = vpop.f32.mrb[0].mxu0
      %v1679 = vpop.f32.mrb[0].mxu0
      %v1680 = vadd.f32 0.0, %v1679
      %v1681 = vpop.f32.mrb[0].mxu0
      %1682 = vmatprep.mubr.bf16.mxu0 0
      %1683 = vmatmul.mubr.bf16.gmra.mrb[0].mxu0 %v614
      %v1684 = vpop.f32.mrb[0].mxu0
      %v1685 = vadd.f32 0.0, %v1684
      %v1686 = vpop.f32.mrb[0].mxu0
      %v1687 = vpop.f32.mrb[0].mxu0
      %v1688 = vadd.f32 0.0, %v1687
      %v1689 = vpop.f32.mrb[0].mxu0
      %1690 = vmatprep.mubr.bf16.mxu0 0
      %1691 = vmatmul.mubr.bf16.gmra.mrb[0].mxu0 %v616
      %v1692 = vpop.f32.mrb[0].mxu0
      %v1693 = vadd.f32 0.0, %v1692
      %v1694 = vpop.f32.mrb[0].mxu0
      %v1695 = vpop.f32.mrb[0].mxu0
      %v1696 = vadd.f32 0.0, %v1695
      %v1697 = vpop.f32.mrb[0].mxu0
      %1698 = vmatprep.mubr.bf16.mxu0 0
      %1699 = vmatmul.mubr.bf16.gmra.mrb[0].mxu0 %v618
      %v1700 = vpop.f32.mrb[0].mxu0
      %v1701 = vadd.f32 0.0, %v1700
      %v1702 = vpop.f32.mrb[0].mxu0
      %v1703 = vpop.f32.mrb[0].mxu0
      %v1704 = vadd.f32 0.0, %v1703
      %v1705 = vpop.f32.mrb[0].mxu0
      %1706 = vmatprep.mubr.bf16.mxu0 0
      %1707 = vmatmul.mubr.bf16.gmra.mrb[0].mxu0 %v620
      %v1708 = vpop.f32.mrb[0].mxu0
      %v1709 = vadd.f32 0.0, %v1708
      %v1710 = vpop.f32.mrb[0].mxu0
      %v1711 = vpop.f32.mrb[0].mxu0
      %v1712 = vadd.f32 0.0, %v1711
      %v1713 = vpop.f32.mrb[0].mxu0
      %1714 = vmatprep.mubr.bf16.mxu0 0
      %1715 = vmatmul.mubr.bf16.gmra.mrb[0].mxu0 %v622
      %v1716 = vpop.f32.mrb[0].mxu0
      %v1717 = vadd.f32 0.0, %v1716
      %v1718 = vpop.f32.mrb[0].mxu0
      %v1719 = vpop.f32.mrb[0].mxu0
      %v1720 = vadd.f32 0.0, %v1719
      %v1721 = vpop.f32.mrb[0].mxu0
      %1722 = vmatprep.mubr.bf16.mxu0 0
      %1723 = vmatmul.mubr.bf16.gmra.mrb[0].mxu0 %v1024
      %v1724 = vpop.f32.mrb[0].mxu0
      %v1725 = vadd.f32 0.0, %v1724
      %v1726 = vpop.f32.mrb[0].mxu0
      %v1727 = vpop.f32.mrb[0].mxu0
      %v1728 = vadd.f32 0.0, %v1727
      %v1729 = vpop.f32.mrb[0].mxu0
      %1730 = vmatprep.mubr.bf16.mxu0 0
      %1731 = vmatmul.mubr.bf16.gmra.mrb[0].mxu0 %v1589
      %v1732 = vpop.f32.mrb[0].mxu0
      %v1733 = vadd.f32 0.0, %v1732
      %v1734 = vpop.f32.mrb[0].mxu0
      %v1735 = vpop.f32.mrb[0].mxu0
      %v1736 = vadd.f32 0.0, %v1735
      %v1737 = vpop.f32.mrb[0].mxu0
      %1738 = vdwg.mxu0
      %v1739 = vadd.f32 %v1557, %v1629
      %v1740 = vadd.f32 %v1558, %v1632
      %v1741 = vadd.f32 %v1559, %v1637
      %v1742 = vadd.f32 %v1560, %v1640
      %v1743 = vadd.f32 %v1561, %v1645
      %v1744 = vadd.f32 %v1562, %v1648
      %v1745 = vadd.f32 %v1563, %v1653
      %v1746 = vadd.f32 %v1564, %v1656
      %v1747 = vadd.f32 %v1565, %v1661
      %v1748 = vadd.f32 %v1566, %v1664
      %v1749 = vadd.f32 %v1567, %v1669
      %v1750 = vadd.f32 %v1568, %v1672
      %v1751 = vadd.f32 %v1569, %v1677
      %v1752 = vadd.f32 %v1570, %v1680
      %v1753 = vadd.f32 %v1571, %v1685
      %v1754 = vadd.f32 %v1572, %v1688
      %v1755 = vadd.f32 %v1573, %v1693
      %v1756 = vadd.f32 %v1574, %v1696
      %v1757 = vadd.f32 %v1575, %v1701
      %v1758 = vadd.f32 %v1576, %v1704
      %v1759 = vadd.f32 %v1577, %v1709
      %v1760 = vadd.f32 %v1578, %v1712
      %v1761 = vadd.f32 %v1579, %v1717
      %v1762 = vadd.f32 %v1580, %v1720
      %v1763 = vadd.f32 %v1581, %v1725
      %v1764 = vadd.f32 %v1582, %v1728
      %v1765 = vadd.f32 %v1583, %v1733
      %v1766 = vadd.f32 %v1584, %v1736
      %v1768 = vunpack.c.l.b16 %v204
      %v1769 = vpack.c.b16 %v1768, %v1768
      %v1770 = vshll.u32 %v1587, 16
      %v1772 = vrot.slane %v1770, 1
      %v1773 = vsel %vm287, %v1211, %v1772
      %v1774 = vshrl.u32 %v1587, 16
      %v1776 = vor.u32 %v1774, %v1772
      %v1778 = vshll.u32 %v1769, 16
      %v1780 = vrot.slane %v1778, 1
      %v1781 = vsel %vm287, %v1776, %v1780
      %v1783 = vsel %vm404, %v1773, 0
      %v1786 = vsel %vm404, %v1781, 0
      %v1789 = vsel %vm447, %v212, 0
      %1791 = vmatprep.subr.bf16.mxu0 0
      %1792 = vmatpush1.bf16.msra.mxu0 %v1789
      %1793 = vmatprep.subr.bf16.mxu0 0
      %1794 = vmatpush1.bf16.msra.mxu0 0
      %1795 = vmatprep.subr.bf16.mxu0 0
      %1796 = vmatpush1.bf16.msra.mxu0 0
      %1797 = vmatprep.subr.bf16.mxu0 0
      %1798 = vmatpush1.bf16.msra.mxu0 0
      %1799 = vmatprep.subr.bf16.mxu0 0
      %1800 = vmatpush1.bf16.msra.mxu0 0
      %1801 = vmatprep.subr.bf16.mxu0 0
      %1802 = vmatpush1.bf16.msra.mxu0 0
      %1803 = vmatprep.subr.bf16.mxu0 0
      %1804 = vmatpush1.bf16.msra.mxu0 0
      %1805 = vmatprep.subr.bf16.mxu0 0
      %1806 = vmatpush1.bf16.msra.mxu0 0
      %1807 = vmatprep.subr.bf16.mxu0 0
      %1808 = vmatpush1.bf16.msra.mxu0 0
      %1809 = vmatprep.subr.bf16.mxu0 0
      %1810 = vmatpush1.bf16.msra.mxu0 0
      %1811 = vmatprep.subr.bf16.mxu0 0
      %1812 = vmatpush1.bf16.msra.mxu0 0
      %1813 = vmatprep.subr.bf16.mxu0 0
      %1814 = vmatpush1.bf16.msra.mxu0 0
      %1815 = vmatprep.subr.bf16.mxu0 0
      %1816 = vmatpush1.bf16.msra.mxu0 0
      %1817 = vmatprep.subr.bf16.mxu0 0
      %1818 = vmatpush1.bf16.msra.mxu0 0
      %1819 = vmatprep.subr.bf16.mxu0 0
      %1820 = vmatpush1.bf16.msra.mxu0 0
      %1821 = vmatprep.subr.bf16.mxu0 0
      %1822 = vmatpush1.bf16.msra.mxu0 0
      %1823 = vmatprep.mubr.bf16.mxu0 0
      %1824 = vmatmul.mubr.bf16.gmra.mrb[0].mxu0 %v412
      %v1825 = vpop.f32.mrb[0].mxu0
      %v1826 = vadd.f32 0.0, %v1825
      %v1827 = vpop.f32.mrb[0].mxu0
      %v1828 = vpop.f32.mrb[0].mxu0
      %v1829 = vadd.f32 0.0, %v1828
      %v1830 = vpop.f32.mrb[0].mxu0
      %1831 = vmatprep.mubr.bf16.mxu0 0
      %1832 = vmatmul.mubr.bf16.gmra.mrb[0].mxu0 %v415
      %v1833 = vpop.f32.mrb[0].mxu0
      %v1834 = vadd.f32 0.0, %v1833
      %v1835 = vpop.f32.mrb[0].mxu0
      %v1836 = vpop.f32.mrb[0].mxu0
      %v1837 = vadd.f32 0.0, %v1836
      %v1838 = vpop.f32.mrb[0].mxu0
      %1839 = vmatprep.mubr.bf16.mxu0 0
      %1840 = vmatmul.mubr.bf16.gmra.mrb[0].mxu0 %v418
      %v1841 = vpop.f32.mrb[0].mxu0
      %v1842 = vadd.f32 0.0, %v1841
      %v1843 = vpop.f32.mrb[0].mxu0
      %v1844 = vpop.f32.mrb[0].mxu0
      %v1845 = vadd.f32 0.0, %v1844
      %v1846 = vpop.f32.mrb[0].mxu0
      %1847 = vmatprep.mubr.bf16.mxu0 0
      %1848 = vmatmul.mubr.bf16.gmra.mrb[0].mxu0 %v421
      %v1849 = vpop.f32.mrb[0].mxu0
      %v1850 = vadd.f32 0.0, %v1849
      %v1851 = vpop.f32.mrb[0].mxu0
      %v1852 = vpop.f32.mrb[0].mxu0
      %v1853 = vadd.f32 0.0, %v1852
      %v1854 = vpop.f32.mrb[0].mxu0
      %1855 = vmatprep.mubr.bf16.mxu0 0
      %1856 = vmatmul.mubr.bf16.gmra.mrb[0].mxu0 %v424
      %v1857 = vpop.f32.mrb[0].mxu0
      %v1858 = vadd.f32 0.0, %v1857
      %v1859 = vpop.f32.mrb[0].mxu0
      %v1860 = vpop.f32.mrb[0].mxu0
      %v1861 = vadd.f32 0.0, %v1860
      %v1862 = vpop.f32.mrb[0].mxu0
      %1863 = vmatprep.mubr.bf16.mxu0 0
      %1864 = vmatmul.mubr.bf16.gmra.mrb[0].mxu0 %v427
      %v1865 = vpop.f32.mrb[0].mxu0
      %v1866 = vadd.f32 0.0, %v1865
      %v1867 = vpop.f32.mrb[0].mxu0
      %v1868 = vpop.f32.mrb[0].mxu0
      %v1869 = vadd.f32 0.0, %v1868
      %v1870 = vpop.f32.mrb[0].mxu0
      %1871 = vmatprep.mubr.bf16.mxu0 0
      %1872 = vmatmul.mubr.bf16.gmra.mrb[0].mxu0 %v430
      %v1873 = vpop.f32.mrb[0].mxu0
      %v1874 = vadd.f32 0.0, %v1873
      %v1875 = vpop.f32.mrb[0].mxu0
      %v1876 = vpop.f32.mrb[0].mxu0
      %v1877 = vadd.f32 0.0, %v1876
      %v1878 = vpop.f32.mrb[0].mxu0
      %1879 = vmatprep.mubr.bf16.mxu0 0
      %1880 = vmatmul.mubr.bf16.gmra.mrb[0].mxu0 %v433
      %v1881 = vpop.f32.mrb[0].mxu0
      %v1882 = vadd.f32 0.0, %v1881
      %v1883 = vpop.f32.mrb[0].mxu0
      %v1884 = vpop.f32.mrb[0].mxu0
      %v1885 = vadd.f32 0.0, %v1884
      %v1886 = vpop.f32.mrb[0].mxu0
      %1887 = vmatprep.mubr.bf16.mxu0 0
      %1888 = vmatmul.mubr.bf16.gmra.mrb[0].mxu0 %v436
      %v1889 = vpop.f32.mrb[0].mxu0
      %v1890 = vadd.f32 0.0, %v1889
      %v1891 = vpop.f32.mrb[0].mxu0
      %v1892 = vpop.f32.mrb[0].mxu0
      %v1893 = vadd.f32 0.0, %v1892
      %v1894 = vpop.f32.mrb[0].mxu0
      %1895 = vmatprep.mubr.bf16.mxu0 0
      %1896 = vmatmul.mubr.bf16.gmra.mrb[0].mxu0 %v439
      %v1897 = vpop.f32.mrb[0].mxu0
      %v1898 = vadd.f32 0.0, %v1897
      %v1899 = vpop.f32.mrb[0].mxu0
      %v1900 = vpop.f32.mrb[0].mxu0
      %v1901 = vadd.f32 0.0, %v1900
      %v1902 = vpop.f32.mrb[0].mxu0
      %1903 = vmatprep.mubr.bf16.mxu0 0
      %1904 = vmatmul.mubr.bf16.gmra.mrb[0].mxu0 %v442
      %v1905 = vpop.f32.mrb[0].mxu0
      %v1906 = vadd.f32 0.0, %v1905
      %v1907 = vpop.f32.mrb[0].mxu0
      %v1908 = vpop.f32.mrb[0].mxu0
      %v1909 = vadd.f32 0.0, %v1908
      %v1910 = vpop.f32.mrb[0].mxu0
      %1911 = vmatprep.mubr.bf16.mxu0 0
      %1912 = vmatmul.mubr.bf16.gmra.mrb[0].mxu0 %v1218
      %v1913 = vpop.f32.mrb[0].mxu0
      %v1914 = vadd.f32 0.0, %v1913
      %v1915 = vpop.f32.mrb[0].mxu0
      %v1916 = vpop.f32.mrb[0].mxu0
      %v1917 = vadd.f32 0.0, %v1916
      %v1918 = vpop.f32.mrb[0].mxu0
      %1919 = vmatprep.mubr.bf16.mxu0 0
      %1920 = vmatmul.mubr.bf16.gmra.mrb[0].mxu0 %v1783
      %v1921 = vpop.f32.mrb[0].mxu0
      %v1922 = vadd.f32 0.0, %v1921
      %v1923 = vpop.f32.mrb[0].mxu0
      %v1924 = vpop.f32.mrb[0].mxu0
      %v1925 = vadd.f32 0.0, %v1924
      %v1926 = vpop.f32.mrb[0].mxu0
      %1927 = vmatprep.mubr.bf16.mxu0 0
      %1928 = vmatmul.mubr.bf16.gmra.mrb[0].mxu0 %v1786
      %v1929 = vpop.f32.mrb[0].mxu0
      %v1930 = vadd.f32 0.0, %v1929
      %v1931 = vpop.f32.mrb[0].mxu0
      %v1932 = vpop.f32.mrb[0].mxu0
      %v1933 = vadd.f32 0.0, %v1932
      %v1934 = vpop.f32.mrb[0].mxu0
      %1935 = vdwg.mxu0
      %v1936 = vadd.f32 %v1739, %v1826
      %v1937 = vadd.f32 %v1740, %v1829
      %v1938 = vadd.f32 %v1741, %v1834
      %v1939 = vadd.f32 %v1742, %v1837
      %v1940 = vadd.f32 %v1743, %v1842
      %v1941 = vadd.f32 %v1744, %v1845
      %v1942 = vadd.f32 %v1745, %v1850
      %v1943 = vadd.f32 %v1746, %v1853
      %v1944 = vadd.f32 %v1747, %v1858
      %v1945 = vadd.f32 %v1748, %v1861
      %v1946 = vadd.f32 %v1749, %v1866
      %v1947 = vadd.f32 %v1750, %v1869
      %v1948 = vadd.f32 %v1751, %v1874
      %v1949 = vadd.f32 %v1752, %v1877
      %v1950 = vadd.f32 %v1753, %v1882
      %v1951 = vadd.f32 %v1754, %v1885
      %v1952 = vadd.f32 %v1755, %v1890
      %v1953 = vadd.f32 %v1756, %v1893
      %v1954 = vadd.f32 %v1757, %v1898
      %v1955 = vadd.f32 %v1758, %v1901
      %v1956 = vadd.f32 %v1759, %v1906
      %v1957 = vadd.f32 %v1760, %v1909
      %v1958 = vadd.f32 %v1761, %v1914
      %v1959 = vadd.f32 %v1762, %v1917
      %v1960 = vadd.f32 %v1763, %v1922
      %v1961 = vadd.f32 %v1764, %v1925
      %v1962 = vadd.f32 %v1765, %v1930
      %v1963 = vadd.f32 %v1766, %v1933
      %v1964 = vrot.slane %v1587, 1
      %v1965 = vsel %vm772, %v1399, %v1964
      %v1966 = vrot.slane %v1769, 1
      %v1967 = vsel %vm772, %v1964, %v1966
      %v1969 = vsel %vm404, %v1965, 0
      %v1972 = vsel %vm404, %v1967, 0
      %v1975 = vsel %vm447, %v213, 0
      %1977 = vmatprep.subr.bf16.mxu0 0
      %1978 = vmatpush1.bf16.msra.mxu0 %v1975
      %1979 = vmatprep.subr.bf16.mxu0 0
      %1980 = vmatpush1.bf16.msra.mxu0 0
      %1981 = vmatprep.subr.bf16.mxu0 0
      %1982 = vmatpush1.bf16.msra.mxu0 0
      %1983 = vmatprep.subr.bf16.mxu0 0
      %1984 = vmatpush1.bf16.msra.mxu0 0
      %1985 = vmatprep.subr.bf16.mxu0 0
      %1986 = vmatpush1.bf16.msra.mxu0 0
      %1987 = vmatprep.subr.bf16.mxu0 0
      %1988 = vmatpush1.bf16.msra.mxu0 0
      %1989 = vmatprep.subr.bf16.mxu0 0
      %1990 = vmatpush1.bf16.msra.mxu0 0
      %1991 = vmatprep.subr.bf16.mxu0 0
      %1992 = vmatpush1.bf16.msra.mxu0 0
      %1993 = vmatprep.subr.bf16.mxu0 0
      %1994 = vmatpush1.bf16.msra.mxu0 0
      %1995 = vmatprep.subr.bf16.mxu0 0
      %1996 = vmatpush1.bf16.msra.mxu0 0
      %1997 = vmatprep.subr.bf16.mxu0 0
      %1998 = vmatpush1.bf16.msra.mxu0 0
      %1999 = vmatprep.subr.bf16.mxu0 0
      %2000 = vmatpush1.bf16.msra.mxu0 0
      %2001 = vmatprep.subr.bf16.mxu0 0
      %2002 = vmatpush1.bf16.msra.mxu0 0
      %2003 = vmatprep.subr.bf16.mxu0 0
      %2004 = vmatpush1.bf16.msra.mxu0 0
      %2005 = vmatprep.subr.bf16.mxu0 0
      %2006 = vmatpush1.bf16.msra.mxu0 0
      %2007 = vmatprep.subr.bf16.mxu0 0
      %2008 = vmatpush1.bf16.msra.mxu0 0
      %2009 = vmatprep.mubr.bf16.mxu0 0
      %2010 = vmatmul.mubr.bf16.gmra.mrb[0].mxu0 %v809
      %v2011 = vpop.f32.mrb[0].mxu0
      %v2012 = vadd.f32 0.0, %v2011
      %v2013 = vpop.f32.mrb[0].mxu0
      %v2014 = vpop.f32.mrb[0].mxu0
      %v2015 = vadd.f32 0.0, %v2014
      %v2016 = vpop.f32.mrb[0].mxu0
      %2017 = vmatprep.mubr.bf16.mxu0 0
      %2018 = vmatmul.mubr.bf16.gmra.mrb[0].mxu0 %v812
      %v2019 = vpop.f32.mrb[0].mxu0
      %v2020 = vadd.f32 0.0, %v2019
      %v2021 = vpop.f32.mrb[0].mxu0
      %v2022 = vpop.f32.mrb[0].mxu0
      %v2023 = vadd.f32 0.0, %v2022
      %v2024 = vpop.f32.mrb[0].mxu0
      %2025 = vmatprep.mubr.bf16.mxu0 0
      %2026 = vmatmul.mubr.bf16.gmra.mrb[0].mxu0 %v815
      %v2027 = vpop.f32.mrb[0].mxu0
      %v2028 = vadd.f32 0.0, %v2027
      %v2029 = vpop.f32.mrb[0].mxu0
      %v2030 = vpop.f32.mrb[0].mxu0
      %v2031 = vadd.f32 0.0, %v2030
      %v2032 = vpop.f32.mrb[0].mxu0
      %2033 = vmatprep.mubr.bf16.mxu0 0
      %2034 = vmatmul.mubr.bf16.gmra.mrb[0].mxu0 %v818
      %v2035 = vpop.f32.mrb[0].mxu0
      %v2036 = vadd.f32 0.0, %v2035
      %v2037 = vpop.f32.mrb[0].mxu0
      %v2038 = vpop.f32.mrb[0].mxu0
      %v2039 = vadd.f32 0.0, %v2038
      %v2040 = vpop.f32.mrb[0].mxu0
      %2041 = vmatprep.mubr.bf16.mxu0 0
      %2042 = vmatmul.mubr.bf16.gmra.mrb[0].mxu0 %v821
      %v2043 = vpop.f32.mrb[0].mxu0
      %v2044 = vadd.f32 0.0, %v2043
      %v2045 = vpop.f32.mrb[0].mxu0
      %v2046 = vpop.f32.mrb[0].mxu0
      %v2047 = vadd.f32 0.0, %v2046
      %v2048 = vpop.f32.mrb[0].mxu0
      %2049 = vmatprep.mubr.bf16.mxu0 0
      %2050 = vmatmul.mubr.bf16.gmra.mrb[0].mxu0 %v824
      %v2051 = vpop.f32.mrb[0].mxu0
      %v2052 = vadd.f32 0.0, %v2051
      %v2053 = vpop.f32.mrb[0].mxu0
      %v2054 = vpop.f32.mrb[0].mxu0
      %v2055 = vadd.f32 0.0, %v2054
      %v2056 = vpop.f32.mrb[0].mxu0
      %2057 = vmatprep.mubr.bf16.mxu0 0
      %2058 = vmatmul.mubr.bf16.gmra.mrb[0].mxu0 %v827
      %v2059 = vpop.f32.mrb[0].mxu0
      %v2060 = vadd.f32 0.0, %v2059
      %v2061 = vpop.f32.mrb[0].mxu0
      %v2062 = vpop.f32.mrb[0].mxu0
      %v2063 = vadd.f32 0.0, %v2062
      %v2064 = vpop.f32.mrb[0].mxu0
      %2065 = vmatprep.mubr.bf16.mxu0 0
      %2066 = vmatmul.mubr.bf16.gmra.mrb[0].mxu0 %v830
      %v2067 = vpop.f32.mrb[0].mxu0
      %v2068 = vadd.f32 0.0, %v2067
      %v2069 = vpop.f32.mrb[0].mxu0
      %v2070 = vpop.f32.mrb[0].mxu0
      %v2071 = vadd.f32 0.0, %v2070
      %v2072 = vpop.f32.mrb[0].mxu0
      %2073 = vmatprep.mubr.bf16.mxu0 0
      %2074 = vmatmul.mubr.bf16.gmra.mrb[0].mxu0 %v833
      %v2075 = vpop.f32.mrb[0].mxu0
      %v2076 = vadd.f32 0.0, %v2075
      %v2077 = vpop.f32.mrb[0].mxu0
      %v2078 = vpop.f32.mrb[0].mxu0
      %v2079 = vadd.f32 0.0, %v2078
      %v2080 = vpop.f32.mrb[0].mxu0
      %2081 = vmatprep.mubr.bf16.mxu0 0
      %2082 = vmatmul.mubr.bf16.gmra.mrb[0].mxu0 %v836
      %v2083 = vpop.f32.mrb[0].mxu0
      %v2084 = vadd.f32 0.0, %v2083
      %v2085 = vpop.f32.mrb[0].mxu0
      %v2086 = vpop.f32.mrb[0].mxu0
      %v2087 = vadd.f32 0.0, %v2086
      %v2088 = vpop.f32.mrb[0].mxu0
      %2089 = vmatprep.mubr.bf16.mxu0 0
      %2090 = vmatmul.mubr.bf16.gmra.mrb[0].mxu0 %v839
      %v2091 = vpop.f32.mrb[0].mxu0
      %v2092 = vadd.f32 0.0, %v2091
      %v2093 = vpop.f32.mrb[0].mxu0
      %v2094 = vpop.f32.mrb[0].mxu0
      %v2095 = vadd.f32 0.0, %v2094
      %v2096 = vpop.f32.mrb[0].mxu0
      %2097 = vmatprep.mubr.bf16.mxu0 0
      %2098 = vmatmul.mubr.bf16.gmra.mrb[0].mxu0 %v1404
      %v2099 = vpop.f32.mrb[0].mxu0
      %v2100 = vadd.f32 0.0, %v2099
      %v2101 = vpop.f32.mrb[0].mxu0
      %v2102 = vpop.f32.mrb[0].mxu0
      %v2103 = vadd.f32 0.0, %v2102
      %v2104 = vpop.f32.mrb[0].mxu0
      %2105 = vmatprep.mubr.bf16.mxu0 0
      %2106 = vmatmul.mubr.bf16.gmra.mrb[0].mxu0 %v1969
      %v2107 = vpop.f32.mrb[0].mxu0
      %v2108 = vadd.f32 0.0, %v2107
      %v2109 = vpop.f32.mrb[0].mxu0
      %v2110 = vpop.f32.mrb[0].mxu0
      %v2111 = vadd.f32 0.0, %v2110
      %v2112 = vpop.f32.mrb[0].mxu0
      %2113 = vmatprep.mubr.bf16.mxu0 0
      %2114 = vmatmul.mubr.bf16.gmra.mrb[0].mxu0 %v1972
      %v2115 = vpop.f32.mrb[0].mxu0
      %v2116 = vadd.f32 0.0, %v2115
      %v2117 = vpop.f32.mrb[0].mxu0
      %v2118 = vpop.f32.mrb[0].mxu0
      %v2119 = vadd.f32 0.0, %v2118
      %v2120 = vpop.f32.mrb[0].mxu0
      %2121 = vdwg.mxu0
      %v2122 = vadd.f32 %v1936, %v2012
      %v2123 = vadd.f32 %v1937, %v2015
      %v2124 = vadd.f32 %v1938, %v2020
      %v2125 = vadd.f32 %v1939, %v2023
      %v2126 = vadd.f32 %v1940, %v2028
      %v2127 = vadd.f32 %v1941, %v2031
      %v2128 = vadd.f32 %v1942, %v2036
      %v2129 = vadd.f32 %v1943, %v2039
      %v2130 = vadd.f32 %v1944, %v2044
      %v2131 = vadd.f32 %v1945, %v2047
      %v2132 = vadd.f32 %v1946, %v2052
      %v2133 = vadd.f32 %v1947, %v2055
      %v2134 = vadd.f32 %v1948, %v2060
      %v2135 = vadd.f32 %v1949, %v2063
      %v2136 = vadd.f32 %v1950, %v2068
      %v2137 = vadd.f32 %v1951, %v2071
      %v2138 = vadd.f32 %v1952, %v2076
      %v2139 = vadd.f32 %v1953, %v2079
      %v2140 = vadd.f32 %v1954, %v2084
      %v2141 = vadd.f32 %v1955, %v2087
      %v2142 = vadd.f32 %v1956, %v2092
      %v2143 = vadd.f32 %v1957, %v2095
      %v2144 = vadd.f32 %v1958, %v2100
      %v2145 = vadd.f32 %v1959, %v2103
      %v2146 = vadd.f32 %v1960, %v2108
      %v2147 = vadd.f32 %v1961, %v2111
      %v2148 = vadd.f32 %v1962, %v2116
      %v2149 = vadd.f32 %v1963, %v2119
      %v2150 = vld [vmem:[%s2] sm:$0x1]
      %v2152 = vlaneseq
      %v2153 = vshrl.u32 %v2152, 7
      %v2154 = vsub.s32 0, %v2153
      %v2155 = vrot.slane %v2150, %v2154
      %v2157 = vadd.f32 %v2122, %v2155
      %v2158 = vadd.f32 %v2123, %v2155
      %v2159 = vadd.f32 %v2124, %v2155
      %v2160 = vadd.f32 %v2125, %v2155
      %v2161 = vadd.f32 %v2126, %v2155
      %v2162 = vadd.f32 %v2127, %v2155
      %v2163 = vadd.f32 %v2128, %v2155
      %v2164 = vadd.f32 %v2129, %v2155
      %v2165 = vadd.f32 %v2130, %v2155
      %v2166 = vadd.f32 %v2131, %v2155
      %v2167 = vadd.f32 %v2132, %v2155
      %v2168 = vadd.f32 %v2133, %v2155
      %v2169 = vadd.f32 %v2134, %v2155
      %v2170 = vadd.f32 %v2135, %v2155
      %v2171 = vadd.f32 %v2136, %v2155
      %v2172 = vadd.f32 %v2137, %v2155
      %v2173 = vadd.f32 %v2138, %v2155
      %v2174 = vadd.f32 %v2139, %v2155
      %v2175 = vadd.f32 %v2140, %v2155
      %v2176 = vadd.f32 %v2141, %v2155
      %v2177 = vadd.f32 %v2142, %v2155
      %v2178 = vadd.f32 %v2143, %v2155
      %v2179 = vadd.f32 %v2144, %v2155
      %v2180 = vadd.f32 %v2145, %v2155
      %v2181 = vadd.f32 %v2146, %v2155
      %v2182 = vadd.f32 %v2147, %v2155
      %v2183 = vadd.f32 %v2148, %v2155
      %v2184 = vadd.f32 %v2149, %v2155
      %2185 = vst [vmem:[%s170] sm:$0xff] %v2157
      %2186 = vst [vmem:[%s170 + $0x8] sm:$0xff] %v2158
      %2187 = vst [vmem:[%s170 + $0x10] sm:$0xff] %v2159
      %2188 = vst [vmem:[%s170 + $0x18] sm:$0xff] %v2160
      %2189 = vst [vmem:[%s170 + $0x20] sm:$0xff] %v2161
      %2190 = vst [vmem:[%s170 + $0x28] sm:$0xff] %v2162
      %2191 = vst [vmem:[%s170 + $0x30] sm:$0xff] %v2163
      %2192 = vst [vmem:[%s170 + $0x38] sm:$0xff] %v2164
      %2193 = vst [vmem:[%s170 + $0x40] sm:$0xff] %v2165
      %2194 = vst [vmem:[%s170 + $0x48] sm:$0xff] %v2166
      %2195 = vst [vmem:[%s170 + $0x50] sm:$0xff] %v2167
      %2196 = vst [vmem:[%s170 + $0x58] sm:$0xff] %v2168
      %2197 = vst [vmem:[%s170 + $0x60] sm:$0xff] %v2169
      %2198 = vst [vmem:[%s170 + $0x68] sm:$0xff] %v2170
      %2199 = vst [vmem:[%s170 + $0x70] sm:$0xff] %v2171
      %2200 = vst [vmem:[%s170 + $0x78] sm:$0xff] %v2172
      %2201 = vst [vmem:[%s170 + $0x80] sm:$0xff] %v2173
      %2202 = vst [vmem:[%s170 + $0x88] sm:$0xff] %v2174
      %2203 = vst [vmem:[%s170 + $0x90] sm:$0xff] %v2175
      %2204 = vst [vmem:[%s170 + $0x98] sm:$0xff] %v2176
      %2205 = vst [vmem:[%s170 + $0xa0] sm:$0xff] %v2177
      %2206 = vst [vmem:[%s170 + $0xa8] sm:$0xff] %v2178
      %2207 = vst [vmem:[%s170 + $0xb0] sm:$0xff] %v2179
      %2208 = vst [vmem:[%s170 + $0xb8] sm:$0xff] %v2180
      %2209 = vst [vmem:[%s170 + $0xc0] sm:$0xff] %v2181
      %2210 = vst [vmem:[%s170 + $0xc8] sm:$0xff] %v2182
      %2211 = vst [vmem:[%s170 + $0xd0] sm:$0xff] %v2183
      %2212 = vst [vmem:[%s170 + $0xd8] sm:$0xff] %v2184
      %p2213 = scmp.lt.s32.totalorder %s14, 1
      %s2214 = scalar_select %p2213, %s14, 1
      %s2215 = smul.addr %s2214, 28
      %s2216 = smul.addr %s2215, 8
      %s2217 = scalar_lea.vmem %s3, %s2216
      // Predicated region
      $region33: #{lora_conv_forward.1} parent=31 // pred_check
        %p2218 = pneg %p100
      $region34: #{lora_conv_forward.1} parent=31 // pred_check_branch
        %2220 = sbr.rel (%p2218) target = $region36
      $region35: #{lora_conv_forward.1} parent=31 // pred_region
        _
      $region36: #{lora_conv_forward.1} parent=31 // pred_fallthru
        _
    $region32: #{lora_conv_forward.1} parent=5 // pred_fallthru
      _
    %p2221 = scmp.le.s32.totalorder 2, %s9
    // Predicated region
    $region37: #{lora_conv_forward.1} parent=5 // pred_check
      %p2222 = pneg %p2221
    $region38: #{lora_conv_forward.1} parent=5 // pred_check_branch
      %2224 = sbr.rel (%p2222) target = $region40
    $region39: #{lora_conv_forward.1} parent=5 // pred_region
      %s2225 = ssub.s32 %s9, 2
      // Predicated region
      $region41: #{lora_conv_forward.1} parent=39 // pred_check
        %p2226 = pneg %p106
      $region42: #{lora_conv_forward.1} parent=39 // pred_check_branch
        %2228 = sbr.rel (%p2226) target = $region44
      $region43: #{lora_conv_forward.1} parent=39 // pred_region
        %p2229 = scmp.lt.s32.totalorder %s15, 1
        %s2230 = scalar_select %p2229, %s15, 1
        %s2231 = smul.addr %s2230, 28
        %s2232 = smul.addr %s2231, 8
        %s2233 = scalar_lea.vmem %s3, %s2232
      $region44: #{lora_conv_forward.1} parent=39 // pred_fallthru
        _
    $region40: #{lora_conv_forward.1} parent=5 // pred_fallthru
      _
  $region6: #{lora_conv_forward.1} parent=0 // loop_footer
    %s13 = sadd.s32 1, %s9
  $region7: #{lora_conv_forward.1} parent=0 // loop_footer_branch
    %8 = sbr.rel target = $region3
  $region8: #{lora_conv_forward.1} parent=0 // loop_exit
    _

</llo_original>
